<compile_context>
chip_gen: v7x
topology: tpu7x:2x2x1
jax: 0.10.0
libtpu: 0.0.40
codegen_flags: <defaults>
</compile_context>

<pallas_src>
import functools

import jax
import jax.numpy as jnp
import numpy as np
from jax.experimental import pallas as pl
from jax.experimental.pallas import tpu as pltpu


# ----------------------------- Pallas kernel --------------------------------
def lstm_decoder_kernel(x_ref, wih_ref, whh_ref, bg_ref, wlin_ref, blin_ref,
                        out_ref, xg_ref, hs_ref, *, t_steps, batch):
    """Full-sequence LSTM recurrence with hoisted input GEMM + deferred projection.

    x_ref    : (T*B, E)   time-major flattened inputs (row = t*B + b)
    wih_ref  : (E, 4H)    input->gate weights (pre-transposed)
    whh_ref  : (H, 4H)    hidden->gate weights (pre-transposed)
    bg_ref   : (1, 4H)    combined gate bias (b_ih + b_hh)
    wlin_ref : (H, V)     output projection weight (pre-transposed)
    blin_ref : (1, V)     output projection bias
    out_ref  : (T*B, V)   time-major logits (lane-dense store)
    xg_ref   : (T*B, 4H)  VMEM scratch: precomputed x@W_ih + b
    hs_ref   : (T*B, H)   VMEM scratch: per-step hidden states
    """
    H, V = wlin_ref.shape

    # 1) Hoisted input-gate contribution: ONE MXU GEMM for all timesteps.
    xg_ref[...] = (
        jnp.dot(x_ref[...], wih_ref[...], preferred_element_type=jnp.float32)
        + bg_ref[...]
    )

    whh = whh_ref[...]                                   # (H, 4H), vreg-resident
    h = jnp.zeros((batch, H), jnp.float32)
    c = jnp.zeros((batch, H), jnp.float32)

    # T is small and static -> unroll at trace time.
    # TODO(synk): if T grows beyond ~16-32, switch to lax.fori_loop carrying (h, c).
    for t in range(t_steps):
        row = t * batch                                  # static, sublane-aligned (batch=8k)
        # Per-step critical path: one K=H dot + elementwise (no concat, no bias add).
        gates = xg_ref[pl.ds(row, batch), :] + jnp.dot(
            h, whh, preferred_element_type=jnp.float32)  # (B, 4H)
        # TODO(synk): with H=32 the gate splits are 32-lane sub-vreg slices (XLU has
        # slack here); at H >= 128 keep each gate block a multiple of 128 lanes.
        i_g = jax.nn.sigmoid(gates[:, 0 * H:1 * H])
        f_g = jax.nn.sigmoid(gates[:, 1 * H:2 * H])
        g_g = jnp.tanh(gates[:, 2 * H:3 * H])
        o_g = jax.nn.sigmoid(gates[:, 3 * H:4 * H])
        c = f_g * c + i_g * g_g
        h = o_g * jnp.tanh(c)
        hs_ref[pl.ds(row, batch), :] = h                 # aligned scratch store

    # 2) Deferred projection: one (T*B, H) @ (H, V) GEMM instead of T tiny matmuls.
    # TODO(synk): at production V, tile the vocab axis (grid over V) and cast the
    # matmul operands to bf16 (fp8 weight on v7x) with f32 accumulation.
    out_ref[...] = (
        jnp.dot(hs_ref[...], wlin_ref[...], preferred_element_type=jnp.float32)
        + blin_ref[...]
    )


# ------------------------------- wrapper -------------------------------------
def decoder_rnn_forward(features, captions, params):
    """Forward pass matching PyTorch DecoderRNN.forward.

    features : (B, E) float32
    captions : (B, L) int32
    returns  : (B, L, V) float32   (seq len T = 1 feature step + (L-1) embeddings)
    """
    embed_table = params["embed"]            # (V, E)
    wih_t = params["wih_t"]                  # (E, 4H)
    whh_t = params["whh_t"]                  # (H, 4H)
    bg = params["b"]                         # (1, 4H)  (= b_ih + b_hh)
    wlin_t = params["wlin_t"]                # (H, V)
    blin = params["blin"]                    # (1, V)

    B, E = features.shape
    H = whh_t.shape[0]
    V = wlin_t.shape[1]

    # Build time-major input without any float transpose: gather embeddings with
    # time-major ids (int transpose is tiny), then prepend the image-feature step.
    capt_tm = jnp.transpose(captions[:, :-1])                       # (L-1, B) int32
    emb_tm = embed_table[capt_tm]                                   # (L-1, B, E)
    x_tm = jnp.concatenate([features[None, :, :], emb_tm],
                           axis=0).astype(jnp.float32)              # (T, B, E)
    T = x_tm.shape[0]

    # Pad batch to full f32 sublanes (8) -> dense vregs, unmasked stores.
    B_pad = ((B + 7) // 8) * 8
    if B_pad != B:
        x_tm = jnp.pad(x_tm, ((0, 0), (0, B_pad - B), (0, 0)))

    # Flatten to (T*B, E): loaded once by the kernel for the hoisted input GEMM.
    x_flat = x_tm.reshape(T * B_pad, E)

    kernel = functools.partial(lstm_decoder_kernel, t_steps=T, batch=B_pad)

    out_tm2d = pl.pallas_call(
        kernel,
        out_shape=jax.ShapeDtypeStruct((T * B_pad, V), jnp.float32),
        grid_spec=pltpu.PrefetchScalarGridSpec(
            num_scalar_prefetch=0,
            grid=(1,),                                   # single kernel invocation
            in_specs=[
                pl.BlockSpec((T * B_pad, E), lambda i: (0, 0)),
                pl.BlockSpec((E, 4 * H), lambda i: (0, 0)),
                pl.BlockSpec((H, 4 * H), lambda i: (0, 0)),
                pl.BlockSpec((1, 4 * H), lambda i: (0, 0)),
                pl.BlockSpec((H, V), lambda i: (0, 0)),
                pl.BlockSpec((1, V), lambda i: (0, 0)),
            ],
            out_specs=pl.BlockSpec((T * B_pad, V), lambda i: (0, 0)),
            scratch_shapes=[
                pltpu.VMEM((T * B_pad, 4 * H), jnp.float32),   # xg scratch
                pltpu.VMEM((T * B_pad, H), jnp.float32),       # hidden-state scratch
            ],
        ),
        # TODO(synk): at production shapes add a 'parallel' grid axis (batch or
        # vocab tiles) so v7x's 2 TensorCores both get work, and set
        # vmem_limit_bytes against v7x's 64 MiB VMEM.
        compiler_params=pltpu.CompilerParams(
            dimension_semantics=("arbitrary",)),
    )(x_flat, wih_t, whh_t, bg, wlin_t, blin)

    # TODO(synk): at production B/T/V, write hs batch-major inside the kernel so
    # this reorder disappears; at these sizes it is a ~32 KB XLA op.
    out_tm = out_tm2d.reshape(T, B_pad, V)
    return jnp.transpose(out_tm, (1, 0, 2))[:B]                      # (B, T, V)


# --------------------------- pure-JAX reference ------------------------------
def decoder_rnn_reference(features, captions, params):
    embed_table = params["embed"]
    wih_t, whh_t, b = params["wih_t"], params["whh_t"], params["b"]
    wlin_t, blin = params["wlin_t"], params["blin"]

    capt = captions[:, :-1]
    emb = embed_table[capt]
    x = jnp.concatenate([features[:, None, :], emb], axis=1)   # (B, T, E)
    B = x.shape[0]
    H = whh_t.shape[0]

    def step(carry, x_t):
        h, c = carry
        gates = x_t @ wih_t + h @ whh_t + b
        i = jax.nn.sigmoid(gates[:, 0 * H:1 * H])
        f = jax.nn.sigmoid(gates[:, 1 * H:2 * H])
        g = jnp.tanh(gates[:, 2 * H:3 * H])
        o = jax.nn.sigmoid(gates[:, 3 * H:4 * H])
        c_new = f * c + i * g
        h_new = o * jnp.tanh(c_new)
        return (h_new, c_new), h_new

    h0 = jnp.zeros((B, H), jnp.float32)
    c0 = jnp.zeros((B, H), jnp.float32)
    _, hs = jax.lax.scan(step, (h0, c0), jnp.transpose(x, (1, 0, 2)))
    logits = hs @ wlin_t + blin                                 # (T, B, V)
    return jnp.transpose(logits, (1, 0, 2))


# --------------------------------- main ---------------------------------------
if __name__ == "__main__":
    # Model sizes (synthetic, deterministic init — no checkpoint loading).
    embed_size = 32     # E
    hidden_size = 32    # H
    vocab_size = 128    # V
    batch = 2           # B
    cap_len = 8         # captions length L  -> LSTM seq len T = L

    key = jax.random.PRNGKey(0)
    ks = jax.random.split(key, 8)
    s = 1.0 / np.sqrt(hidden_size)

    params = {
        "embed":  jax.random.normal(ks[0], (vocab_size, embed_size), jnp.float32) * 0.1,
        # PyTorch LSTM stores weight_ih (4H, E) / weight_hh (4H, H); we keep transposes.
        "wih_t":  jax.random.uniform(ks[1], (embed_size, 4 * hidden_size), jnp.float32, -s, s),
        "whh_t":  jax.random.uniform(ks[2], (hidden_size, 4 * hidden_size), jnp.float32, -s, s),
        "b":      (jax.random.uniform(ks[3], (1, 4 * hidden_size), jnp.float32, -s, s)
                   + jax.random.uniform(ks[4], (1, 4 * hidden_size), jnp.float32, -s, s)),
        "wlin_t": jax.random.uniform(ks[5], (hidden_size, vocab_size), jnp.float32, -s, s),
        "blin":   jax.random.uniform(ks[6], (1, vocab_size), jnp.float32, -s, s),
    }

    features = jax.random.normal(ks[7], (batch, embed_size), jnp.float32)
    captions = jax.random.randint(jax.random.PRNGKey(42), (batch, cap_len), 0, vocab_size,
                                  dtype=jnp.int32)

    # TODO(synk): DecoderRNN.sample() (greedy autoregressive decode with host-side
    # .item() loop) is not implemented; only forward() is covered.
    out = jax.jit(decoder_rnn_forward)(features, captions, params)
    out = jax.block_until_ready(out)

    ref = decoder_rnn_reference(features, captions, params)
    assert out.shape == (batch, cap_len, vocab_size), out.shape
    np.testing.assert_allclose(np.asarray(out), np.asarray(ref), rtol=1e-4, atol=1e-4)

    print("KERNEL_OK")
</pallas_src>

<mosaic_0001>
module attributes {stable_mosaic.version = 11 : i64} {
  func.func @lstm_decoder_kernel(%arg0: i32, %arg1: memref<64x32xf32, #tpu.memory_space<vmem>>, %arg2: memref<32x128xf32, #tpu.memory_space<vmem>>, %arg3: memref<32x128xf32, #tpu.memory_space<vmem>>, %arg4: memref<1x128xf32, #tpu.memory_space<vmem>>, %arg5: memref<32x128xf32, #tpu.memory_space<vmem>>, %arg6: memref<1x128xf32, #tpu.memory_space<vmem>>, %arg7: memref<64x128xf32, #tpu.memory_space<vmem>>, %arg8: memref<64x128xf32, #tpu.memory_space<vmem>>, %arg9: memref<64x32xf32, #tpu.memory_space<vmem>>) attributes {dimension_semantics = [#tpu.dimension_semantics<arbitrary>], iteration_bounds = array<i64: 1>, scalar_prefetch = 0 : i64, scratch_operands = 2 : i64, tpu.core_type = #tpu.core_type<tc>, window_params = [{pipeline_mode = #tpu.pipeline_mode<synchronous>, transform_indices = @transform_0, window_bounds = array<i64: 64, 32>}, {pipeline_mode = #tpu.pipeline_mode<synchronous>, transform_indices = @transform_1, window_bounds = array<i64: 32, 128>}, {pipeline_mode = #tpu.pipeline_mode<synchronous>, transform_indices = @transform_2, window_bounds = array<i64: 32, 128>}, {pipeline_mode = #tpu.pipeline_mode<synchronous>, transform_indices = @transform_3, window_bounds = array<i64: 1, 128>}, {pipeline_mode = #tpu.pipeline_mode<synchronous>, transform_indices = @transform_4, window_bounds = array<i64: 32, 128>}, {pipeline_mode = #tpu.pipeline_mode<synchronous>, transform_indices = @transform_5, window_bounds = array<i64: 1, 128>}, {pipeline_mode = #tpu.pipeline_mode<synchronous>, transform_indices = @transform_6, window_bounds = array<i64: 64, 128>}]} {
    %c0 = arith.constant 0 : index
    %c0_0 = arith.constant 0 : index
    %0 = vector.load %arg1[%c0, %c0_0] : memref<64x32xf32, #tpu.memory_space<vmem>>, vector<64x32xf32>
    %c0_1 = arith.constant 0 : index
    %c0_2 = arith.constant 0 : index
    %1 = vector.load %arg2[%c0_1, %c0_2] : memref<32x128xf32, #tpu.memory_space<vmem>>, vector<32x128xf32>
    %cst = arith.constant dense<0.000000e+00> : vector<64x128xf32>
    %2 = tpu.matmul %0, %1, %cst {dimension_numbers = #tpu.dot_dimension_numbers<[1], [0], [0], [1], [0, 0, 1, 1], [], []>} : vector<64x32xf32>, vector<32x128xf32>, vector<64x128xf32> -> vector<64x128xf32>
    %c0_3 = arith.constant 0 : index
    %c0_4 = arith.constant 0 : index
    %3 = vector.load %arg4[%c0_3, %c0_4] : memref<1x128xf32, #tpu.memory_space<vmem>>, vector<1x128xf32>
    %4 = vector.broadcast %3 : vector<1x128xf32> to vector<64x128xf32>
    %5 = arith.addf %2, %4 : vector<64x128xf32>
    %c0_5 = arith.constant 0 : index
    %c0_6 = arith.constant 0 : index
    %6 = vector.load %arg8[%c0_5, %c0_6] : memref<64x128xf32, #tpu.memory_space<vmem>>, vector<64x128xf32>
    tpu.vector_store %arg8[%c0_5, %c0_6], %5 {strides = array<i32>} : memref<64x128xf32, #tpu.memory_space<vmem>>, vector<64x128xf32>,
    %c0_7 = arith.constant 0 : index
    %c0_8 = arith.constant 0 : index
    %7 = vector.load %arg3[%c0_7, %c0_8] : memref<32x128xf32, #tpu.memory_space<vmem>>, vector<32x128xf32>
    %cst_9 = arith.constant 0.000000e+00 : f32
    %8 = vector.broadcast %cst_9 : f32 to vector<8x32xf32>
    %cst_10 = arith.constant 0.000000e+00 : f32
    %9 = vector.broadcast %cst_10 : f32 to vector<8x32xf32>
    %c0_11 = arith.constant 0 : index
    %c0_12 = arith.constant 0 : index
    %10 = vector.load %arg8[%c0_11, %c0_12] : memref<64x128xf32, #tpu.memory_space<vmem>>, vector<8x128xf32>
    %cst_13 = arith.constant dense<0.000000e+00> : vector<8x128xf32>
    %11 = tpu.matmul %8, %7, %cst_13 {dimension_numbers = #tpu.dot_dimension_numbers<[1], [0], [0], [1], [0, 0, 1, 1], [], []>} : vector<8x32xf32>, vector<32x128xf32>, vector<8x128xf32> -> vector<8x128xf32>
    %12 = arith.addf %10, %11 : vector<8x128xf32>
    %13 = vector.extract_strided_slice %12 {offsets = [0, 0], sizes = [8, 32], strides = [1, 1]} : vector<8x128xf32> to vector<8x32xf32>
    %14 = arith.negf %13 : vector<8x32xf32>
    %15 = math.exp %14 : vector<8x32xf32>
    %cst_14 = arith.constant 1.000000e+00 : f32
    %16 = vector.broadcast %cst_14 : f32 to vector<8x32xf32>
    %17 = arith.addf %16, %15 : vector<8x32xf32>
    %18 = arith.divf %16, %17 : vector<8x32xf32>
    %19 = vector.extract_strided_slice %12 {offsets = [0, 32], sizes = [8, 32], strides = [1, 1]} : vector<8x128xf32> to vector<8x32xf32>
    %20 = arith.negf %19 : vector<8x32xf32>
    %21 = math.exp %20 : vector<8x32xf32>
    %cst_15 = arith.constant 1.000000e+00 : f32
    %22 = vector.broadcast %cst_15 : f32 to vector<8x32xf32>
    %23 = arith.addf %22, %21 : vector<8x32xf32>
    %24 = arith.divf %22, %23 : vector<8x32xf32>
    %25 = vector.extract_strided_slice %12 {offsets = [0, 64], sizes = [8, 32], strides = [1, 1]} : vector<8x128xf32> to vector<8x32xf32>
    %26 = math.tanh %25 : vector<8x32xf32>
    %27 = vector.extract_strided_slice %12 {offsets = [0, 96], sizes = [8, 32], strides = [1, 1]} : vector<8x128xf32> to vector<8x32xf32>
    %28 = arith.negf %27 : vector<8x32xf32>
    %29 = math.exp %28 : vector<8x32xf32>
    %cst_16 = arith.constant 1.000000e+00 : f32
    %30 = vector.broadcast %cst_16 : f32 to vector<8x32xf32>
    %31 = arith.addf %30, %29 : vector<8x32xf32>
    %32 = arith.divf %30, %31 : vector<8x32xf32>
    %33 = arith.mulf %24, %9 : vector<8x32xf32>
    %34 = arith.mulf %18, %26 : vector<8x32xf32>
    %35 = arith.addf %33, %34 : vector<8x32xf32>
    %36 = math.tanh %35 : vector<8x32xf32>
    %37 = arith.mulf %32, %36 : vector<8x32xf32>
    %c0_17 = arith.constant 0 : index
    %c0_18 = arith.constant 0 : index
    %38 = vector.load %arg9[%c0_17, %c0_18] : memref<64x32xf32, #tpu.memory_space<vmem>>, vector<8x32xf32>
    tpu.vector_store %arg9[%c0_17, %c0_18], %37 {strides = array<i32>} : memref<64x32xf32, #tpu.memory_space<vmem>>, vector<8x32xf32>,
    %c8 = arith.constant 8 : index
    %c0_19 = arith.constant 0 : index
    %39 = vector.load %arg8[%c8, %c0_19] : memref<64x128xf32, #tpu.memory_space<vmem>>, vector<8x128xf32>
    %cst_20 = arith.constant dense<0.000000e+00> : vector<8x128xf32>
    %40 = tpu.matmul %37, %7, %cst_20 {dimension_numbers = #tpu.dot_dimension_numbers<[1], [0], [0], [1], [0, 0, 1, 1], [], []>} : vector<8x32xf32>, vector<32x128xf32>, vector<8x128xf32> -> vector<8x128xf32>
    %41 = arith.addf %39, %40 : vector<8x128xf32>
    %42 = vector.extract_strided_slice %41 {offsets = [0, 0], sizes = [8, 32], strides = [1, 1]} : vector<8x128xf32> to vector<8x32xf32>
    %43 = arith.negf %42 : vector<8x32xf32>
    %44 = math.exp %43 : vector<8x32xf32>
    %cst_21 = arith.constant 1.000000e+00 : f32
    %45 = vector.broadcast %cst_21 : f32 to vector<8x32xf32>
    %46 = arith.addf %45, %44 : vector<8x32xf32>
    %47 = arith.divf %45, %46 : vector<8x32xf32>
    %48 = vector.extract_strided_slice %41 {offsets = [0, 32], sizes = [8, 32], strides = [1, 1]} : vector<8x128xf32> to vector<8x32xf32>
    %49 = arith.negf %48 : vector<8x32xf32>
    %50 = math.exp %49 : vector<8x32xf32>
    %cst_22 = arith.constant 1.000000e+00 : f32
    %51 = vector.broadcast %cst_22 : f32 to vector<8x32xf32>
    %52 = arith.addf %51, %50 : vector<8x32xf32>
    %53 = arith.divf %51, %52 : vector<8x32xf32>
    %54 = vector.extract_strided_slice %41 {offsets = [0, 64], sizes = [8, 32], strides = [1, 1]} : vector<8x128xf32> to vector<8x32xf32>
    %55 = math.tanh %54 : vector<8x32xf32>
    %56 = vector.extract_strided_slice %41 {offsets = [0, 96], sizes = [8, 32], strides = [1, 1]} : vector<8x128xf32> to vector<8x32xf32>
    %57 = arith.negf %56 : vector<8x32xf32>
    %58 = math.exp %57 : vector<8x32xf32>
    %cst_23 = arith.constant 1.000000e+00 : f32
    %59 = vector.broadcast %cst_23 : f32 to vector<8x32xf32>
    %60 = arith.addf %59, %58 : vector<8x32xf32>
    %61 = arith.divf %59, %60 : vector<8x32xf32>
    %62 = arith.mulf %53, %35 : vector<8x32xf32>
    %63 = arith.mulf %47, %55 : vector<8x32xf32>
    %64 = arith.addf %62, %63 : vector<8x32xf32>
    %65 = math.tanh %64 : vector<8x32xf32>
    %66 = arith.mulf %61, %65 : vector<8x32xf32>
    %c8_24 = arith.constant 8 : index
    %c0_25 = arith.constant 0 : index
    %67 = vector.load %arg9[%c8_24, %c0_25] : memref<64x32xf32, #tpu.memory_space<vmem>>, vector<8x32xf32>
    tpu.vector_store %arg9[%c8_24, %c0_25], %66 {strides = array<i32>} : memref<64x32xf32, #tpu.memory_space<vmem>>, vector<8x32xf32>,
    %c16 = arith.constant 16 : index
    %c0_26 = arith.constant 0 : index
    %68 = vector.load %arg8[%c16, %c0_26] : memref<64x128xf32, #tpu.memory_space<vmem>>, vector<8x128xf32>
    %cst_27 = arith.constant dense<0.000000e+00> : vector<8x128xf32>
    %69 = tpu.matmul %66, %7, %cst_27 {dimension_numbers = #tpu.dot_dimension_numbers<[1], [0], [0], [1], [0, 0, 1, 1], [], []>} : vector<8x32xf32>, vector<32x128xf32>, vector<8x128xf32> -> vector<8x128xf32>
    %70 = arith.addf %68, %69 : vector<8x128xf32>
    %71 = vector.extract_strided_slice %70 {offsets = [0, 0], sizes = [8, 32], strides = [1, 1]} : vector<8x128xf32> to vector<8x32xf32>
    %72 = arith.negf %71 : vector<8x32xf32>
    %73 = math.exp %72 : vector<8x32xf32>
    %cst_28 = arith.constant 1.000000e+00 : f32
    %74 = vector.broadcast %cst_28 : f32 to vector<8x32xf32>
    %75 = arith.addf %74, %73 : vector<8x32xf32>
    %76 = arith.divf %74, %75 : vector<8x32xf32>
    %77 = vector.extract_strided_slice %70 {offsets = [0, 32], sizes = [8, 32], strides = [1, 1]} : vector<8x128xf32> to vector<8x32xf32>
    %78 = arith.negf %77 : vector<8x32xf32>
    %79 = math.exp %78 : vector<8x32xf32>
    %cst_29 = arith.constant 1.000000e+00 : f32
    %80 = vector.broadcast %cst_29 : f32 to vector<8x32xf32>
    %81 = arith.addf %80, %79 : vector<8x32xf32>
    %82 = arith.divf %80, %81 : vector<8x32xf32>
    %83 = vector.extract_strided_slice %70 {offsets = [0, 64], sizes = [8, 32], strides = [1, 1]} : vector<8x128xf32> to vector<8x32xf32>
    %84 = math.tanh %83 : vector<8x32xf32>
    %85 = vector.extract_strided_slice %70 {offsets = [0, 96], sizes = [8, 32], strides = [1, 1]} : vector<8x128xf32> to vector<8x32xf32>
    %86 = arith.negf %85 : vector<8x32xf32>
    %87 = math.exp %86 : vector<8x32xf32>
    %cst_30 = arith.constant 1.000000e+00 : f32
    %88 = vector.broadcast %cst_30 : f32 to vector<8x32xf32>
    %89 = arith.addf %88, %87 : vector<8x32xf32>
    %90 = arith.divf %88, %89 : vector<8x32xf32>
    %91 = arith.mulf %82, %64 : vector<8x32xf32>
    %92 = arith.mulf %76, %84 : vector<8x32xf32>
    %93 = arith.addf %91, %92 : vector<8x32xf32>
    %94 = math.tanh %93 : vector<8x32xf32>
    %95 = arith.mulf %90, %94 : vector<8x32xf32>
    %c16_31 = arith.constant 16 : index
    %c0_32 = arith.constant 0 : index
    %96 = vector.load %arg9[%c16_31, %c0_32] : memref<64x32xf32, #tpu.memory_space<vmem>>, vector<8x32xf32>
    tpu.vector_store %arg9[%c16_31, %c0_32], %95 {strides = array<i32>} : memref<64x32xf32, #tpu.memory_space<vmem>>, vector<8x32xf32>,
    %c24 = arith.constant 24 : index
    %c0_33 = arith.constant 0 : index
    %97 = vector.load %arg8[%c24, %c0_33] : memref<64x128xf32, #tpu.memory_space<vmem>>, vector<8x128xf32>
    %cst_34 = arith.constant dense<0.000000e+00> : vector<8x128xf32>
    %98 = tpu.matmul %95, %7, %cst_34 {dimension_numbers = #tpu.dot_dimension_numbers<[1], [0], [0], [1], [0, 0, 1, 1], [], []>} : vector<8x32xf32>, vector<32x128xf32>, vector<8x128xf32> -> vector<8x128xf32>
    %99 = arith.addf %97, %98 : vector<8x128xf32>
    %100 = vector.extract_strided_slice %99 {offsets = [0, 0], sizes = [8, 32], strides = [1, 1]} : vector<8x128xf32> to vector<8x32xf32>
    %101 = arith.negf %100 : vector<8x32xf32>
    %102 = math.exp %101 : vector<8x32xf32>
    %cst_35 = arith.constant 1.000000e+00 : f32
    %103 = vector.broadcast %cst_35 : f32 to vector<8x32xf32>
    %104 = arith.addf %103, %102 : vector<8x32xf32>
    %105 = arith.divf %103, %104 : vector<8x32xf32>
    %106 = vector.extract_strided_slice %99 {offsets = [0, 32], sizes = [8, 32], strides = [1, 1]} : vector<8x128xf32> to vector<8x32xf32>
    %107 = arith.negf %106 : vector<8x32xf32>
    %108 = math.exp %107 : vector<8x32xf32>
    %cst_36 = arith.constant 1.000000e+00 : f32
    %109 = vector.broadcast %cst_36 : f32 to vector<8x32xf32>
    %110 = arith.addf %109, %108 : vector<8x32xf32>
    %111 = arith.divf %109, %110 : vector<8x32xf32>
    %112 = vector.extract_strided_slice %99 {offsets = [0, 64], sizes = [8, 32], strides = [1, 1]} : vector<8x128xf32> to vector<8x32xf32>
    %113 = math.tanh %112 : vector<8x32xf32>
    %114 = vector.extract_strided_slice %99 {offsets = [0, 96], sizes = [8, 32], strides = [1, 1]} : vector<8x128xf32> to vector<8x32xf32>
    %115 = arith.negf %114 : vector<8x32xf32>
    %116 = math.exp %115 : vector<8x32xf32>
    %cst_37 = arith.constant 1.000000e+00 : f32
    %117 = vector.broadcast %cst_37 : f32 to vector<8x32xf32>
    %118 = arith.addf %117, %116 : vector<8x32xf32>
    %119 = arith.divf %117, %118 : vector<8x32xf32>
    %120 = arith.mulf %111, %93 : vector<8x32xf32>
    %121 = arith.mulf %105, %113 : vector<8x32xf32>
    %122 = arith.addf %120, %121 : vector<8x32xf32>
    %123 = math.tanh %122 : vector<8x32xf32>
    %124 = arith.mulf %119, %123 : vector<8x32xf32>
    %c24_38 = arith.constant 24 : index
    %c0_39 = arith.constant 0 : index
    %125 = vector.load %arg9[%c24_38, %c0_39] : memref<64x32xf32, #tpu.memory_space<vmem>>, vector<8x32xf32>
    tpu.vector_store %arg9[%c24_38, %c0_39], %124 {strides = array<i32>} : memref<64x32xf32, #tpu.memory_space<vmem>>, vector<8x32xf32>,
    %c32 = arith.constant 32 : index
    %c0_40 = arith.constant 0 : index
    %126 = vector.load %arg8[%c32, %c0_40] : memref<64x128xf32, #tpu.memory_space<vmem>>, vector<8x128xf32>
    %cst_41 = arith.constant dense<0.000000e+00> : vector<8x128xf32>
    %127 = tpu.matmul %124, %7, %cst_41 {dimension_numbers = #tpu.dot_dimension_numbers<[1], [0], [0], [1], [0, 0, 1, 1], [], []>} : vector<8x32xf32>, vector<32x128xf32>, vector<8x128xf32> -> vector<8x128xf32>
    %128 = arith.addf %126, %127 : vector<8x128xf32>
    %129 = vector.extract_strided_slice %128 {offsets = [0, 0], sizes = [8, 32], strides = [1, 1]} : vector<8x128xf32> to vector<8x32xf32>
    %130 = arith.negf %129 : vector<8x32xf32>
    %131 = math.exp %130 : vector<8x32xf32>
    %cst_42 = arith.constant 1.000000e+00 : f32
    %132 = vector.broadcast %cst_42 : f32 to vector<8x32xf32>
    %133 = arith.addf %132, %131 : vector<8x32xf32>
    %134 = arith.divf %132, %133 : vector<8x32xf32>
    %135 = vector.extract_strided_slice %128 {offsets = [0, 32], sizes = [8, 32], strides = [1, 1]} : vector<8x128xf32> to vector<8x32xf32>
    %136 = arith.negf %135 : vector<8x32xf32>
    %137 = math.exp %136 : vector<8x32xf32>
    %cst_43 = arith.constant 1.000000e+00 : f32
    %138 = vector.broadcast %cst_43 : f32 to vector<8x32xf32>
    %139 = arith.addf %138, %137 : vector<8x32xf32>
    %140 = arith.divf %138, %139 : vector<8x32xf32>
    %141 = vector.extract_strided_slice %128 {offsets = [0, 64], sizes = [8, 32], strides = [1, 1]} : vector<8x128xf32> to vector<8x32xf32>
    %142 = math.tanh %141 : vector<8x32xf32>
    %143 = vector.extract_strided_slice %128 {offsets = [0, 96], sizes = [8, 32], strides = [1, 1]} : vector<8x128xf32> to vector<8x32xf32>
    %144 = arith.negf %143 : vector<8x32xf32>
    %145 = math.exp %144 : vector<8x32xf32>
    %cst_44 = arith.constant 1.000000e+00 : f32
    %146 = vector.broadcast %cst_44 : f32 to vector<8x32xf32>
    %147 = arith.addf %146, %145 : vector<8x32xf32>
    %148 = arith.divf %146, %147 : vector<8x32xf32>
    %149 = arith.mulf %140, %122 : vector<8x32xf32>
    %150 = arith.mulf %134, %142 : vector<8x32xf32>
    %151 = arith.addf %149, %150 : vector<8x32xf32>
    %152 = math.tanh %151 : vector<8x32xf32>
    %153 = arith.mulf %148, %152 : vector<8x32xf32>
    %c32_45 = arith.constant 32 : index
    %c0_46 = arith.constant 0 : index
    %154 = vector.load %arg9[%c32_45, %c0_46] : memref<64x32xf32, #tpu.memory_space<vmem>>, vector<8x32xf32>
    tpu.vector_store %arg9[%c32_45, %c0_46], %153 {strides = array<i32>} : memref<64x32xf32, #tpu.memory_space<vmem>>, vector<8x32xf32>,
    %c40 = arith.constant 40 : index
    %c0_47 = arith.constant 0 : index
    %155 = vector.load %arg8[%c40, %c0_47] : memref<64x128xf32, #tpu.memory_space<vmem>>, vector<8x128xf32>
    %cst_48 = arith.constant dense<0.000000e+00> : vector<8x128xf32>
    %156 = tpu.matmul %153, %7, %cst_48 {dimension_numbers = #tpu.dot_dimension_numbers<[1], [0], [0], [1], [0, 0, 1, 1], [], []>} : vector<8x32xf32>, vector<32x128xf32>, vector<8x128xf32> -> vector<8x128xf32>
    %157 = arith.addf %155, %156 : vector<8x128xf32>
    %158 = vector.extract_strided_slice %157 {offsets = [0, 0], sizes = [8, 32], strides = [1, 1]} : vector<8x128xf32> to vector<8x32xf32>
    %159 = arith.negf %158 : vector<8x32xf32>
    %160 = math.exp %159 : vector<8x32xf32>
    %cst_49 = arith.constant 1.000000e+00 : f32
    %161 = vector.broadcast %cst_49 : f32 to vector<8x32xf32>
    %162 = arith.addf %161, %160 : vector<8x32xf32>
    %163 = arith.divf %161, %162 : vector<8x32xf32>
    %164 = vector.extract_strided_slice %157 {offsets = [0, 32], sizes = [8, 32], strides = [1, 1]} : vector<8x128xf32> to vector<8x32xf32>
    %165 = arith.negf %164 : vector<8x32xf32>
    %166 = math.exp %165 : vector<8x32xf32>
    %cst_50 = arith.constant 1.000000e+00 : f32
    %167 = vector.broadcast %cst_50 : f32 to vector<8x32xf32>
    %168 = arith.addf %167, %166 : vector<8x32xf32>
    %169 = arith.divf %167, %168 : vector<8x32xf32>
    %170 = vector.extract_strided_slice %157 {offsets = [0, 64], sizes = [8, 32], strides = [1, 1]} : vector<8x128xf32> to vector<8x32xf32>
    %171 = math.tanh %170 : vector<8x32xf32>
    %172 = vector.extract_strided_slice %157 {offsets = [0, 96], sizes = [8, 32], strides = [1, 1]} : vector<8x128xf32> to vector<8x32xf32>
    %173 = arith.negf %172 : vector<8x32xf32>
    %174 = math.exp %173 : vector<8x32xf32>
    %cst_51 = arith.constant 1.000000e+00 : f32
    %175 = vector.broadcast %cst_51 : f32 to vector<8x32xf32>
    %176 = arith.addf %175, %174 : vector<8x32xf32>
    %177 = arith.divf %175, %176 : vector<8x32xf32>
    %178 = arith.mulf %169, %151 : vector<8x32xf32>
    %179 = arith.mulf %163, %171 : vector<8x32xf32>
    %180 = arith.addf %178, %179 : vector<8x32xf32>
    %181 = math.tanh %180 : vector<8x32xf32>
    %182 = arith.mulf %177, %181 : vector<8x32xf32>
    %c40_52 = arith.constant 40 : index
    %c0_53 = arith.constant 0 : index
    %183 = vector.load %arg9[%c40_52, %c0_53] : memref<64x32xf32, #tpu.memory_space<vmem>>, vector<8x32xf32>
    tpu.vector_store %arg9[%c40_52, %c0_53], %182 {strides = array<i32>} : memref<64x32xf32, #tpu.memory_space<vmem>>, vector<8x32xf32>,
    %c48 = arith.constant 48 : index
    %c0_54 = arith.constant 0 : index
    %184 = vector.load %arg8[%c48, %c0_54] : memref<64x128xf32, #tpu.memory_space<vmem>>, vector<8x128xf32>
    %cst_55 = arith.constant dense<0.000000e+00> : vector<8x128xf32>
    %185 = tpu.matmul %182, %7, %cst_55 {dimension_numbers = #tpu.dot_dimension_numbers<[1], [0], [0], [1], [0, 0, 1, 1], [], []>} : vector<8x32xf32>, vector<32x128xf32>, vector<8x128xf32> -> vector<8x128xf32>
    %186 = arith.addf %184, %185 : vector<8x128xf32>
    %187 = vector.extract_strided_slice %186 {offsets = [0, 0], sizes = [8, 32], strides = [1, 1]} : vector<8x128xf32> to vector<8x32xf32>
    %188 = arith.negf %187 : vector<8x32xf32>
    %189 = math.exp %188 : vector<8x32xf32>
    %cst_56 = arith.constant 1.000000e+00 : f32
    %190 = vector.broadcast %cst_56 : f32 to vector<8x32xf32>
    %191 = arith.addf %190, %189 : vector<8x32xf32>
    %192 = arith.divf %190, %191 : vector<8x32xf32>
    %193 = vector.extract_strided_slice %186 {offsets = [0, 32], sizes = [8, 32], strides = [1, 1]} : vector<8x128xf32> to vector<8x32xf32>
    %194 = arith.negf %193 : vector<8x32xf32>
    %195 = math.exp %194 : vector<8x32xf32>
    %cst_57 = arith.constant 1.000000e+00 : f32
    %196 = vector.broadcast %cst_57 : f32 to vector<8x32xf32>
    %197 = arith.addf %196, %195 : vector<8x32xf32>
    %198 = arith.divf %196, %197 : vector<8x32xf32>
    %199 = vector.extract_strided_slice %186 {offsets = [0, 64], sizes = [8, 32], strides = [1, 1]} : vector<8x128xf32> to vector<8x32xf32>
    %200 = math.tanh %199 : vector<8x32xf32>
    %201 = vector.extract_strided_slice %186 {offsets = [0, 96], sizes = [8, 32], strides = [1, 1]} : vector<8x128xf32> to vector<8x32xf32>
    %202 = arith.negf %201 : vector<8x32xf32>
    %203 = math.exp %202 : vector<8x32xf32>
    %cst_58 = arith.constant 1.000000e+00 : f32
    %204 = vector.broadcast %cst_58 : f32 to vector<8x32xf32>
    %205 = arith.addf %204, %203 : vector<8x32xf32>
    %206 = arith.divf %204, %205 : vector<8x32xf32>
    %207 = arith.mulf %198, %180 : vector<8x32xf32>
    %208 = arith.mulf %192, %200 : vector<8x32xf32>
    %209 = arith.addf %207, %208 : vector<8x32xf32>
    %210 = math.tanh %209 : vector<8x32xf32>
    %211 = arith.mulf %206, %210 : vector<8x32xf32>
    %c48_59 = arith.constant 48 : index
    %c0_60 = arith.constant 0 : index
    %212 = vector.load %arg9[%c48_59, %c0_60] : memref<64x32xf32, #tpu.memory_space<vmem>>, vector<8x32xf32>
    tpu.vector_store %arg9[%c48_59, %c0_60], %211 {strides = array<i32>} : memref<64x32xf32, #tpu.memory_space<vmem>>, vector<8x32xf32>,
    %c56 = arith.constant 56 : index
    %c0_61 = arith.constant 0 : index
    %213 = vector.load %arg8[%c56, %c0_61] : memref<64x128xf32, #tpu.memory_space<vmem>>, vector<8x128xf32>
    %cst_62 = arith.constant dense<0.000000e+00> : vector<8x128xf32>
    %214 = tpu.matmul %211, %7, %cst_62 {dimension_numbers = #tpu.dot_dimension_numbers<[1], [0], [0], [1], [0, 0, 1, 1], [], []>} : vector<8x32xf32>, vector<32x128xf32>, vector<8x128xf32> -> vector<8x128xf32>
    %215 = arith.addf %213, %214 : vector<8x128xf32>
    %216 = vector.extract_strided_slice %215 {offsets = [0, 0], sizes = [8, 32], strides = [1, 1]} : vector<8x128xf32> to vector<8x32xf32>
    %217 = arith.negf %216 : vector<8x32xf32>
    %218 = math.exp %217 : vector<8x32xf32>
    %cst_63 = arith.constant 1.000000e+00 : f32
    %219 = vector.broadcast %cst_63 : f32 to vector<8x32xf32>
    %220 = arith.addf %219, %218 : vector<8x32xf32>
    %221 = arith.divf %219, %220 : vector<8x32xf32>
    %222 = vector.extract_strided_slice %215 {offsets = [0, 32], sizes = [8, 32], strides = [1, 1]} : vector<8x128xf32> to vector<8x32xf32>
    %223 = arith.negf %222 : vector<8x32xf32>
    %224 = math.exp %223 : vector<8x32xf32>
    %cst_64 = arith.constant 1.000000e+00 : f32
    %225 = vector.broadcast %cst_64 : f32 to vector<8x32xf32>
    %226 = arith.addf %225, %224 : vector<8x32xf32>
    %227 = arith.divf %225, %226 : vector<8x32xf32>
    %228 = vector.extract_strided_slice %215 {offsets = [0, 64], sizes = [8, 32], strides = [1, 1]} : vector<8x128xf32> to vector<8x32xf32>
    %229 = math.tanh %228 : vector<8x32xf32>
    %230 = vector.extract_strided_slice %215 {offsets = [0, 96], sizes = [8, 32], strides = [1, 1]} : vector<8x128xf32> to vector<8x32xf32>
    %231 = arith.negf %230 : vector<8x32xf32>
    %232 = math.exp %231 : vector<8x32xf32>
    %cst_65 = arith.constant 1.000000e+00 : f32
    %233 = vector.broadcast %cst_65 : f32 to vector<8x32xf32>
    %234 = arith.addf %233, %232 : vector<8x32xf32>
    %235 = arith.divf %233, %234 : vector<8x32xf32>
    %236 = arith.mulf %227, %209 : vector<8x32xf32>
    %237 = arith.mulf %221, %229 : vector<8x32xf32>
    %238 = arith.addf %236, %237 : vector<8x32xf32>
    %239 = math.tanh %238 : vector<8x32xf32>
    %240 = arith.mulf %235, %239 : vector<8x32xf32>
    %c56_66 = arith.constant 56 : index
    %c0_67 = arith.constant 0 : index
    %241 = vector.load %arg9[%c56_66, %c0_67] : memref<64x32xf32, #tpu.memory_space<vmem>>, vector<8x32xf32>
    tpu.vector_store %arg9[%c56_66, %c0_67], %240 {strides = array<i32>} : memref<64x32xf32, #tpu.memory_space<vmem>>, vector<8x32xf32>,
    %c0_68 = arith.constant 0 : index
    %c0_69 = arith.constant 0 : index
    %242 = vector.load %arg9[%c0_68, %c0_69] : memref<64x32xf32, #tpu.memory_space<vmem>>, vector<64x32xf32>
    %c0_70 = arith.constant 0 : index
    %c0_71 = arith.constant 0 : index
    %243 = vector.load %arg5[%c0_70, %c0_71] : memref<32x128xf32, #tpu.memory_space<vmem>>, vector<32x128xf32>
    %cst_72 = arith.constant dense<0.000000e+00> : vector<64x128xf32>
    %244 = tpu.matmul %242, %243, %cst_72 {dimension_numbers = #tpu.dot_dimension_numbers<[1], [0], [0], [1], [0, 0, 1, 1], [], []>} : vector<64x32xf32>, vector<32x128xf32>, vector<64x128xf32> -> vector<64x128xf32>
    %c0_73 = arith.constant 0 : index
    %c0_74 = arith.constant 0 : index
    %245 = vector.load %arg6[%c0_73, %c0_74] : memref<1x128xf32, #tpu.memory_space<vmem>>, vector<1x128xf32>
    %246 = vector.broadcast %245 : vector<1x128xf32> to vector<64x128xf32>
    %247 = arith.addf %244, %246 : vector<64x128xf32>
    %c0_75 = arith.constant 0 : index
    %c0_76 = arith.constant 0 : index
    %248 = vector.load %arg7[%c0_75, %c0_76] : memref<64x128xf32, #tpu.memory_space<vmem>>, vector<64x128xf32>
    tpu.vector_store %arg7[%c0_75, %c0_76], %247 {strides = array<i32>} : memref<64x128xf32, #tpu.memory_space<vmem>>, vector<64x128xf32>,
    return
  }
  func.func @transform_0(%arg0: i32) -> (i32, i32) {
    %c0_i32 = arith.constant 0 : i32
    %c0_i32_0 = arith.constant 0 : i32
    %c0_i32_1 = arith.constant 0 : i32
    return %c0_i32, %c0_i32_0 : i32, i32
  }
  func.func @transform_1(%arg0: i32) -> (i32, i32) {
    %c0_i32 = arith.constant 0 : i32
    %c0_i32_0 = arith.constant 0 : i32
    %c0_i32_1 = arith.constant 0 : i32
    return %c0_i32, %c0_i32_0 : i32, i32
  }
  func.func @transform_2(%arg0: i32) -> (i32, i32) {
    %c0_i32 = arith.constant 0 : i32
    %c0_i32_0 = arith.constant 0 : i32
    %c0_i32_1 = arith.constant 0 : i32
    return %c0_i32, %c0_i32_0 : i32, i32
  }
  func.func @transform_3(%arg0: i32) -> (i32, i32) {
    %c0_i32 = arith.constant 0 : i32
    %c0_i32_0 = arith.constant 0 : i32
    %c0_i32_1 = arith.constant 0 : i32
    return %c0_i32, %c0_i32_0 : i32, i32
  }
  func.func @transform_4(%arg0: i32) -> (i32, i32) {
    %c0_i32 = arith.constant 0 : i32
    %c0_i32_0 = arith.constant 0 : i32
    %c0_i32_1 = arith.constant 0 : i32
    return %c0_i32, %c0_i32_0 : i32, i32
  }
  func.func @transform_5(%arg0: i32) -> (i32, i32) {
    %c0_i32 = arith.constant 0 : i32
    %c0_i32_0 = arith.constant 0 : i32
    %c0_i32_1 = arith.constant 0 : i32
    return %c0_i32, %c0_i32_0 : i32, i32
  }
  func.func @transform_6(%arg0: i32) -> (i32, i32) {
    %c0_i32 = arith.constant 0 : i32
    %c0_i32_0 = arith.constant 0 : i32
    %c0_i32_1 = arith.constant 0 : i32
    return %c0_i32, %c0_i32_0 : i32, i32
  }
}

</mosaic_0001>

<llo_original>
// kernel: decoder_rnn_forward.1
$region0: #{decoder_rnn_forward.1}
  #allocation0 [shape = 'u32[]', space=smem, size = 0x4, offset = 0x4, fixed_abs, tag = 'smem constant byte address 0x4 - core index']
  #allocation1 [shape = 'u32[144,128]{1,0:T(1,128)}', space=vmem, size = 0x12000, scoped, tag = 'internal scratch']
  #allocation2 [shape = 'f32[64,128]{1,0:T(8,128)}', space=vmem, size = 0x8000, scoped, tag = 'scratch operand']
  #allocation3 [shape = 'f32[64,32]{1,0:T(8,128)}', space=vmem, size = 0x8000, scoped, tag = 'scratch operand']
  %s0 = inlined_call_operand.vmem [shape: f32[64,32], index: 0, kind: input, shape index: {}]
  %s1 = inlined_call_operand.vmem [shape: f32[32,128], index: 1, kind: input, shape index: {}]
  %s2 = inlined_call_operand.vmem [shape: f32[32,128], index: 2, kind: input, shape index: {}]
  %s3 = inlined_call_operand.vmem [shape: f32[1,128], index: 3, kind: input, shape index: {}]
  %s4 = inlined_call_operand.vmem [shape: f32[32,128], index: 4, kind: input, shape index: {}]
  %s5 = inlined_call_operand.vmem [shape: f32[1,128], index: 5, kind: input, shape index: {}]
  %s6 = inlined_call_operand.vmem [shape: f32[64,128], index: 6, kind: output, shape index: {}]
  %s7 = sld [smem:[#allocation0]]
  $region34: #{decoder_rnn_forward.1} parent=0
    _
  %s9 = ssub.s32 1, %s7
  %s10 = scalar_select 0, %s9, %s7
  // Predicated region
  $region2: #{decoder_rnn_forward.1} parent=0 // pred_check
    _
  $region3: #{decoder_rnn_forward.1} parent=0 // pred_check_branch
    %12 = sbr.rel (0) target = $region5
  $region4: #{decoder_rnn_forward.1} parent=0 // pred_region
    _
  $region5: #{decoder_rnn_forward.1} parent=0 // pred_fallthru
    _
  // Predicated region
  $region6: #{decoder_rnn_forward.1} parent=0 // pred_check
    _
  $region7: #{decoder_rnn_forward.1} parent=0 // pred_check_branch
    %14 = sbr.rel (0) target = $region9
  $region8: #{decoder_rnn_forward.1} parent=0 // pred_region
    _
  $region9: #{decoder_rnn_forward.1} parent=0 // pred_fallthru
    _
  // Predicated region
  $region10: #{decoder_rnn_forward.1} parent=0 // pred_check
    _
  $region11: #{decoder_rnn_forward.1} parent=0 // pred_check_branch
    %16 = sbr.rel (0) target = $region13
  $region12: #{decoder_rnn_forward.1} parent=0 // pred_region
    _
  $region13: #{decoder_rnn_forward.1} parent=0 // pred_fallthru
    _
  // Predicated region
  $region14: #{decoder_rnn_forward.1} parent=0 // pred_check
    _
  $region15: #{decoder_rnn_forward.1} parent=0 // pred_check_branch
    %18 = sbr.rel (0) target = $region17
  $region16: #{decoder_rnn_forward.1} parent=0 // pred_region
    _
  $region17: #{decoder_rnn_forward.1} parent=0 // pred_fallthru
    _
  // Predicated region
  $region18: #{decoder_rnn_forward.1} parent=0 // pred_check
    _
  $region19: #{decoder_rnn_forward.1} parent=0 // pred_check_branch
    %20 = sbr.rel (0) target = $region21
  $region20: #{decoder_rnn_forward.1} parent=0 // pred_region
    _
  $region21: #{decoder_rnn_forward.1} parent=0 // pred_fallthru
    _
  // Predicated region
  $region22: #{decoder_rnn_forward.1} parent=0 // pred_check
    _
  $region23: #{decoder_rnn_forward.1} parent=0 // pred_check_branch
    %22 = sbr.rel (0) target = $region25
  $region24: #{decoder_rnn_forward.1} parent=0 // pred_region
    _
  $region25: #{decoder_rnn_forward.1} parent=0 // pred_fallthru
    _
  %v23 = vld [vmem:[%s0] sm:$0xff]
  %v24 = vld [vmem:[%s0 + $0x8] sm:$0xff]
  %v25 = vld [vmem:[%s0 + $0x10] sm:$0xff]
  %v26 = vld [vmem:[%s0 + $0x18] sm:$0xff]
  %v27 = vld [vmem:[%s0 + $0x20] sm:$0xff]
  %v28 = vld [vmem:[%s0 + $0x28] sm:$0xff]
  %v29 = vld [vmem:[%s0 + $0x30] sm:$0xff]
  %v30 = vld [vmem:[%s0 + $0x38] sm:$0xff]
  %v31 = vld [vmem:[%s1] sm:$0xff]
  %v32 = vld [vmem:[%s1 + $0x8] sm:$0xff]
  %v33 = vld [vmem:[%s1 + $0x10] sm:$0xff]
  %v34 = vld [vmem:[%s1 + $0x18] sm:$0xff]
  %v35 = vld [vmem:[%s3] sm:$0x1]
  %v37 = vlaneseq
  %v38 = vshrl.u32 %v37, 7
  %v39 = vsub.s32 0, %v38
  %v40 = vrot.slane %v35, %v39
  %vm42 = vcmask 261120
  %v44 = vsel %vm42, %v23, 0
  %v47 = vsel %vm42, %v24, 0
  %v50 = vsel %vm42, %v25, 0
  %v53 = vsel %vm42, %v26, 0
  %v56 = vsel %vm42, %v27, 0
  %v59 = vsel %vm42, %v28, 0
  %v62 = vsel %vm42, %v29, 0
  %v65 = vsel %vm42, %v30, 0
  %67 = vmatprep.subr.mxu0 0.0
  %68 = vmatpush1.msra.mxu0 %v31
  %69 = vmatprep.subr.mxu0 0.0
  %70 = vmatpush1.msra.mxu0 %v32
  %71 = vmatprep.subr.mxu0 0.0
  %72 = vmatpush1.msra.mxu0 %v33
  %73 = vmatprep.subr.mxu0 0.0
  %74 = vmatpush1.msra.mxu0 %v34
  %75 = vmatprep.subr.mxu0 0.0
  %76 = vmatpush1.msra.mxu0 0.0
  %77 = vmatprep.subr.mxu0 0.0
  %78 = vmatpush1.msra.mxu0 0.0
  %79 = vmatprep.subr.mxu0 0.0
  %80 = vmatpush1.msra.mxu0 0.0
  %81 = vmatprep.subr.mxu0 0.0
  %82 = vmatpush1.msra.mxu0 0.0
  %83 = vmatprep.subr.mxu0 0.0
  %84 = vmatpush1.msra.mxu0 0.0
  %85 = vmatprep.subr.mxu0 0.0
  %86 = vmatpush1.msra.mxu0 0.0
  %87 = vmatprep.subr.mxu0 0.0
  %88 = vmatpush1.msra.mxu0 0.0
  %89 = vmatprep.subr.mxu0 0.0
  %90 = vmatpush1.msra.mxu0 0.0
  %91 = vmatprep.subr.mxu0 0.0
  %92 = vmatpush1.msra.mxu0 0.0
  %93 = vmatprep.subr.mxu0 0.0
  %94 = vmatpush1.msra.mxu0 0.0
  %95 = vmatprep.subr.mxu0 0.0
  %96 = vmatpush1.msra.mxu0 0.0
  %97 = vmatprep.subr.mxu0 0.0
  %98 = vmatpush1.msra.mxu0 0.0
  %99 = vmatprep.subr.mxu0 0.0
  %100 = vmatpush1.msra.mxu0 0.0
  %101 = vmatprep.subr.mxu0 0.0
  %102 = vmatpush1.msra.mxu0 0.0
  %103 = vmatprep.subr.mxu0 0.0
  %104 = vmatpush1.msra.mxu0 0.0
  %105 = vmatprep.subr.mxu0 0.0
  %106 = vmatpush1.msra.mxu0 0.0
  %107 = vmatprep.subr.mxu0 0.0
  %108 = vmatpush1.msra.mxu0 0.0
  %109 = vmatprep.subr.mxu0 0.0
  %110 = vmatpush1.msra.mxu0 0.0
  %111 = vmatprep.subr.mxu0 0.0
  %112 = vmatpush1.msra.mxu0 0.0
  %113 = vmatprep.subr.mxu0 0.0
  %114 = vmatpush1.msra.mxu0 0.0
  %115 = vmatprep.subr.mxu0 0.0
  %116 = vmatpush1.msra.mxu0 0.0
  %117 = vmatprep.subr.mxu0 0.0
  %118 = vmatpush1.msra.mxu0 0.0
  %119 = vmatprep.subr.mxu0 0.0
  %120 = vmatpush1.msra.mxu0 0.0
  %121 = vmatprep.subr.mxu0 0.0
  %122 = vmatpush1.msra.mxu0 0.0
  %123 = vmatprep.subr.mxu0 0.0
  %124 = vmatpush1.msra.mxu0 0.0
  %125 = vmatprep.subr.mxu0 0.0
  %126 = vmatpush1.msra.mxu0 0.0
  %127 = vmatprep.subr.mxu0 0.0
  %128 = vmatpush1.msra.mxu0 0.0
  %129 = vmatprep.subr.mxu0 0.0
  %130 = vmatpush1.msra.mxu0 0.0
  %131 = vmatprep.mubr.f32.mxu0 0.0
  %132 = vmatmul.mubr.f32.gmra.mrb[0].mxu0 %v44
  %v133 = vpop.f32.mrb[0].mxu0
  %v134 = vadd.f32 %v40, %v133
  %v135 = vpop.f32.mrb[0].mxu0
  %136 = vmatprep.mubr.f32.mxu0 0.0
  %137 = vmatmul.mubr.f32.gmra.mrb[0].mxu0 %v47
  %v138 = vpop.f32.mrb[0].mxu0
  %v139 = vadd.f32 %v40, %v138
  %v140 = vpop.f32.mrb[0].mxu0
  %141 = vmatprep.mubr.f32.mxu0 0.0
  %142 = vmatmul.mubr.f32.gmra.mrb[0].mxu0 %v50
  %v143 = vpop.f32.mrb[0].mxu0
  %v144 = vadd.f32 %v40, %v143
  %v145 = vpop.f32.mrb[0].mxu0
  %146 = vmatprep.mubr.f32.mxu0 0.0
  %147 = vmatmul.mubr.f32.gmra.mrb[0].mxu0 %v53
  %v148 = vpop.f32.mrb[0].mxu0
  %v149 = vadd.f32 %v40, %v148
  %v150 = vpop.f32.mrb[0].mxu0
  %151 = vmatprep.mubr.f32.mxu0 0.0
  %152 = vmatmul.mubr.f32.gmra.mrb[0].mxu0 %v56
  %v153 = vpop.f32.mrb[0].mxu0
  %v154 = vadd.f32 %v40, %v153
  %v155 = vpop.f32.mrb[0].mxu0
  %156 = vmatprep.mubr.f32.mxu0 0.0
  %157 = vmatmul.mubr.f32.gmra.mrb[0].mxu0 %v59
  %v158 = vpop.f32.mrb[0].mxu0
  %v159 = vadd.f32 %v40, %v158
  %v160 = vpop.f32.mrb[0].mxu0
  %161 = vmatprep.mubr.f32.mxu0 0.0
  %162 = vmatmul.mubr.f32.gmra.mrb[0].mxu0 %v62
  %v163 = vpop.f32.mrb[0].mxu0
  %v164 = vadd.f32 %v40, %v163
  %v165 = vpop.f32.mrb[0].mxu0
  %166 = vmatprep.mubr.f32.mxu0 0.0
  %167 = vmatmul.mubr.f32.gmra.mrb[0].mxu0 %v65
  %v168 = vpop.f32.mrb[0].mxu0
  %v169 = vadd.f32 %v40, %v168
  %v170 = vpop.f32.mrb[0].mxu0
  %171 = vdwg.mxu0
  %172 = vst [vmem:[#allocation2] sm:$0xff] %v134
  %173 = vst [vmem:[#allocation2 + $0x8] sm:$0xff] %v139
  %174 = vst [vmem:[#allocation2 + $0x10] sm:$0xff] %v144
  %175 = vst [vmem:[#allocation2 + $0x18] sm:$0xff] %v149
  %176 = vst [vmem:[#allocation2 + $0x20] sm:$0xff] %v154
  %177 = vst [vmem:[#allocation2 + $0x28] sm:$0xff] %v159
  %178 = vst [vmem:[#allocation2 + $0x30] sm:$0xff] %v164
  %179 = vst [vmem:[#allocation2 + $0x38] sm:$0xff] %v169
  %v180 = vld [vmem:[%s2] sm:$0xff]
  %v181 = vld [vmem:[%s2 + $0x8] sm:$0xff]
  %v182 = vld [vmem:[%s2 + $0x10] sm:$0xff]
  %v183 = vld [vmem:[%s2 + $0x18] sm:$0xff]
  %v184 = vld [vmem:[#allocation2] sm:$0xff]
  %v186 = vsel %vm42, 0.0, 0
  %188 = vmatprep.subr.mxu0 0.0
  %189 = vmatpush1.msra.mxu0 %v180
  %190 = vmatprep.subr.mxu0 0.0
  %191 = vmatpush1.msra.mxu0 %v181
  %192 = vmatprep.subr.mxu0 0.0
  %193 = vmatpush1.msra.mxu0 %v182
  %194 = vmatprep.subr.mxu0 0.0
  %195 = vmatpush1.msra.mxu0 %v183
  %196 = vmatprep.subr.mxu0 0.0
  %197 = vmatpush1.msra.mxu0 0.0
  %198 = vmatprep.subr.mxu0 0.0
  %199 = vmatpush1.msra.mxu0 0.0
  %200 = vmatprep.subr.mxu0 0.0
  %201 = vmatpush1.msra.mxu0 0.0
  %202 = vmatprep.subr.mxu0 0.0
  %203 = vmatpush1.msra.mxu0 0.0
  %204 = vmatprep.subr.mxu0 0.0
  %205 = vmatpush1.msra.mxu0 0.0
  %206 = vmatprep.subr.mxu0 0.0
  %207 = vmatpush1.msra.mxu0 0.0
  %208 = vmatprep.subr.mxu0 0.0
  %209 = vmatpush1.msra.mxu0 0.0
  %210 = vmatprep.subr.mxu0 0.0
  %211 = vmatpush1.msra.mxu0 0.0
  %212 = vmatprep.subr.mxu0 0.0
  %213 = vmatpush1.msra.mxu0 0.0
  %214 = vmatprep.subr.mxu0 0.0
  %215 = vmatpush1.msra.mxu0 0.0
  %216 = vmatprep.subr.mxu0 0.0
  %217 = vmatpush1.msra.mxu0 0.0
  %218 = vmatprep.subr.mxu0 0.0
  %219 = vmatpush1.msra.mxu0 0.0
  %220 = vmatprep.subr.mxu0 0.0
  %221 = vmatpush1.msra.mxu0 0.0
  %222 = vmatprep.subr.mxu0 0.0
  %223 = vmatpush1.msra.mxu0 0.0
  %224 = vmatprep.subr.mxu0 0.0
  %225 = vmatpush1.msra.mxu0 0.0
  %226 = vmatprep.subr.mxu0 0.0
  %227 = vmatpush1.msra.mxu0 0.0
  %228 = vmatprep.subr.mxu0 0.0
  %229 = vmatpush1.msra.mxu0 0.0
  %230 = vmatprep.subr.mxu0 0.0
  %231 = vmatpush1.msra.mxu0 0.0
  %232 = vmatprep.subr.mxu0 0.0
  %233 = vmatpush1.msra.mxu0 0.0
  %234 = vmatprep.subr.mxu0 0.0
  %235 = vmatpush1.msra.mxu0 0.0
  %236 = vmatprep.subr.mxu0 0.0
  %237 = vmatpush1.msra.mxu0 0.0
  %238 = vmatprep.subr.mxu0 0.0
  %239 = vmatpush1.msra.mxu0 0.0
  %240 = vmatprep.subr.mxu0 0.0
  %241 = vmatpush1.msra.mxu0 0.0
  %242 = vmatprep.subr.mxu0 0.0
  %243 = vmatpush1.msra.mxu0 0.0
  %244 = vmatprep.subr.mxu0 0.0
  %245 = vmatpush1.msra.mxu0 0.0
  %246 = vmatprep.subr.mxu0 0.0
  %247 = vmatpush1.msra.mxu0 0.0
  %248 = vmatprep.subr.mxu0 0.0
  %249 = vmatpush1.msra.mxu0 0.0
  %250 = vmatprep.subr.mxu0 0.0
  %251 = vmatpush1.msra.mxu0 0.0
  %252 = vmatprep.mubr.f32.mxu0 0.0
  %253 = vmatmul.mubr.f32.gmra.mrb[0].mxu0 %v186
  %v254 = vpop.f32.mrb[0].mxu0
  %v255 = vadd.f32 0.0, %v254
  %v256 = vpop.f32.mrb[0].mxu0
  %257 = vdwg.mxu0
  %v258 = vadd.f32 %v184, %v255
  %v259 = vxor.u32 %v258, 2147483648
  %v260 = vmul.f32 %v259, 1.442695
  %v261 = vpow.pop %v260
  %v262 = vadd.f32 %v261, 1.0
  %v263 = vrcp.pop %v262
  %v264 = vmul.f32 1.0, %v263
  %v265 = vtanh.pop %v258
  %v266 = vmul.f32 %v264, 0.0
  %268 = vrot.lane.b32.xlu0 %v265, 64
  %v269 = vpop.permute.xlu0 %268
  %v271 = vmul.f32 %v264, %v269
  %273 = vrot.lane.b32.xlu0 %v271, 32
  %v274 = vpop.permute.xlu0 %273
  %v276 = vadd.f32 %v266, %v274
  %v277 = vtanh.pop %v276
  %279 = vrot.lane.b32.xlu0 %v277, 64
  %v280 = vpop.permute.xlu0 %279
  %v282 = vmul.f32 %v264, %v280
  %284 = vrot.lane.b32.xlu0 %v282, 32
  %v285 = vpop.permute.xlu0 %284
  %287 = vst.msk [vmem:[#allocation3] sm:$0xff] %vm42, %v285
  %v288 = vld [vmem:[#allocation2 + $0x8] sm:$0xff]
  %v289 = vsel %vm42, %v285, 0
  %291 = vmatprep.subr.mxu0 0.0
  %292 = vmatpush1.msra.mxu0 %v180
  %293 = vmatprep.subr.mxu0 0.0
  %294 = vmatpush1.msra.mxu0 %v181
  %295 = vmatprep.subr.mxu0 0.0
  %296 = vmatpush1.msra.mxu0 %v182
  %297 = vmatprep.subr.mxu0 0.0
  %298 = vmatpush1.msra.mxu0 %v183
  %299 = vmatprep.subr.mxu0 0.0
  %300 = vmatpush1.msra.mxu0 0.0
  %301 = vmatprep.subr.mxu0 0.0
  %302 = vmatpush1.msra.mxu0 0.0
  %303 = vmatprep.subr.mxu0 0.0
  %304 = vmatpush1.msra.mxu0 0.0
  %305 = vmatprep.subr.mxu0 0.0
  %306 = vmatpush1.msra.mxu0 0.0
  %307 = vmatprep.subr.mxu0 0.0
  %308 = vmatpush1.msra.mxu0 0.0
  %309 = vmatprep.subr.mxu0 0.0
  %310 = vmatpush1.msra.mxu0 0.0
  %311 = vmatprep.subr.mxu0 0.0
  %312 = vmatpush1.msra.mxu0 0.0
  %313 = vmatprep.subr.mxu0 0.0
  %314 = vmatpush1.msra.mxu0 0.0
  %315 = vmatprep.subr.mxu0 0.0
  %316 = vmatpush1.msra.mxu0 0.0
  %317 = vmatprep.subr.mxu0 0.0
  %318 = vmatpush1.msra.mxu0 0.0
  %319 = vmatprep.subr.mxu0 0.0
  %320 = vmatpush1.msra.mxu0 0.0
  %321 = vmatprep.subr.mxu0 0.0
  %322 = vmatpush1.msra.mxu0 0.0
  %323 = vmatprep.subr.mxu0 0.0
  %324 = vmatpush1.msra.mxu0 0.0
  %325 = vmatprep.subr.mxu0 0.0
  %326 = vmatpush1.msra.mxu0 0.0
  %327 = vmatprep.subr.mxu0 0.0
  %328 = vmatpush1.msra.mxu0 0.0
  %329 = vmatprep.subr.mxu0 0.0
  %330 = vmatpush1.msra.mxu0 0.0
  %331 = vmatprep.subr.mxu0 0.0
  %332 = vmatpush1.msra.mxu0 0.0
  %333 = vmatprep.subr.mxu0 0.0
  %334 = vmatpush1.msra.mxu0 0.0
  %335 = vmatprep.subr.mxu0 0.0
  %336 = vmatpush1.msra.mxu0 0.0
  %337 = vmatprep.subr.mxu0 0.0
  %338 = vmatpush1.msra.mxu0 0.0
  %339 = vmatprep.subr.mxu0 0.0
  %340 = vmatpush1.msra.mxu0 0.0
  %341 = vmatprep.subr.mxu0 0.0
  %342 = vmatpush1.msra.mxu0 0.0
  %343 = vmatprep.subr.mxu0 0.0
  %344 = vmatpush1.msra.mxu0 0.0
  %345 = vmatprep.subr.mxu0 0.0
  %346 = vmatpush1.msra.mxu0 0.0
  %347 = vmatprep.subr.mxu0 0.0
  %348 = vmatpush1.msra.mxu0 0.0
  %349 = vmatprep.subr.mxu0 0.0
  %350 = vmatpush1.msra.mxu0 0.0
  %351 = vmatprep.subr.mxu0 0.0
  %352 = vmatpush1.msra.mxu0 0.0
  %353 = vmatprep.subr.mxu0 0.0
  %354 = vmatpush1.msra.mxu0 0.0
  %355 = vmatprep.mubr.f32.mxu0 0.0
  %356 = vmatmul.mubr.f32.gmra.mrb[0].mxu0 %v289
  %v357 = vpop.f32.mrb[0].mxu0
  %v358 = vadd.f32 0.0, %v357
  %v359 = vpop.f32.mrb[0].mxu0
  %360 = vdwg.mxu0
  %v361 = vadd.f32 %v288, %v358
  %v362 = vxor.u32 %v361, 2147483648
  %v363 = vmul.f32 %v362, 1.442695
  %v364 = vpow.pop %v363
  %v365 = vadd.f32 %v364, 1.0
  %v366 = vrcp.pop %v365
  %v367 = vmul.f32 1.0, %v366
  %v368 = vtanh.pop %v361
  %v369 = vmul.f32 %v367, %v276
  %371 = vrot.lane.b32.xlu0 %v368, 64
  %v372 = vpop.permute.xlu0 %371
  %v374 = vmul.f32 %v367, %v372
  %376 = vrot.lane.b32.xlu0 %v374, 32
  %v377 = vpop.permute.xlu0 %376
  %v379 = vadd.f32 %v369, %v377
  %v380 = vtanh.pop %v379
  %382 = vrot.lane.b32.xlu0 %v380, 64
  %v383 = vpop.permute.xlu0 %382
  %v385 = vmul.f32 %v367, %v383
  %387 = vrot.lane.b32.xlu0 %v385, 32
  %v388 = vpop.permute.xlu0 %387
  %390 = vst.msk [vmem:[#allocation3 + $0x8] sm:$0xff] %vm42, %v388
  %v391 = vld [vmem:[#allocation2 + $0x10] sm:$0xff]
  %v392 = vsel %vm42, %v388, 0
  %394 = vmatprep.subr.mxu0 0.0
  %395 = vmatpush1.msra.mxu0 %v180
  %396 = vmatprep.subr.mxu0 0.0
  %397 = vmatpush1.msra.mxu0 %v181
  %398 = vmatprep.subr.mxu0 0.0
  %399 = vmatpush1.msra.mxu0 %v182
  %400 = vmatprep.subr.mxu0 0.0
  %401 = vmatpush1.msra.mxu0 %v183
  %402 = vmatprep.subr.mxu0 0.0
  %403 = vmatpush1.msra.mxu0 0.0
  %404 = vmatprep.subr.mxu0 0.0
  %405 = vmatpush1.msra.mxu0 0.0
  %406 = vmatprep.subr.mxu0 0.0
  %407 = vmatpush1.msra.mxu0 0.0
  %408 = vmatprep.subr.mxu0 0.0
  %409 = vmatpush1.msra.mxu0 0.0
  %410 = vmatprep.subr.mxu0 0.0
  %411 = vmatpush1.msra.mxu0 0.0
  %412 = vmatprep.subr.mxu0 0.0
  %413 = vmatpush1.msra.mxu0 0.0
  %414 = vmatprep.subr.mxu0 0.0
  %415 = vmatpush1.msra.mxu0 0.0
  %416 = vmatprep.subr.mxu0 0.0
  %417 = vmatpush1.msra.mxu0 0.0
  %418 = vmatprep.subr.mxu0 0.0
  %419 = vmatpush1.msra.mxu0 0.0
  %420 = vmatprep.subr.mxu0 0.0
  %421 = vmatpush1.msra.mxu0 0.0
  %422 = vmatprep.subr.mxu0 0.0
  %423 = vmatpush1.msra.mxu0 0.0
  %424 = vmatprep.subr.mxu0 0.0
  %425 = vmatpush1.msra.mxu0 0.0
  %426 = vmatprep.subr.mxu0 0.0
  %427 = vmatpush1.msra.mxu0 0.0
  %428 = vmatprep.subr.mxu0 0.0
  %429 = vmatpush1.msra.mxu0 0.0
  %430 = vmatprep.subr.mxu0 0.0
  %431 = vmatpush1.msra.mxu0 0.0
  %432 = vmatprep.subr.mxu0 0.0
  %433 = vmatpush1.msra.mxu0 0.0
  %434 = vmatprep.subr.mxu0 0.0
  %435 = vmatpush1.msra.mxu0 0.0
  %436 = vmatprep.subr.mxu0 0.0
  %437 = vmatpush1.msra.mxu0 0.0
  %438 = vmatprep.subr.mxu0 0.0
  %439 = vmatpush1.msra.mxu0 0.0
  %440 = vmatprep.subr.mxu0 0.0
  %441 = vmatpush1.msra.mxu0 0.0
  %442 = vmatprep.subr.mxu0 0.0
  %443 = vmatpush1.msra.mxu0 0.0
  %444 = vmatprep.subr.mxu0 0.0
  %445 = vmatpush1.msra.mxu0 0.0
  %446 = vmatprep.subr.mxu0 0.0
  %447 = vmatpush1.msra.mxu0 0.0
  %448 = vmatprep.subr.mxu0 0.0
  %449 = vmatpush1.msra.mxu0 0.0
  %450 = vmatprep.subr.mxu0 0.0
  %451 = vmatpush1.msra.mxu0 0.0
  %452 = vmatprep.subr.mxu0 0.0
  %453 = vmatpush1.msra.mxu0 0.0
  %454 = vmatprep.subr.mxu0 0.0
  %455 = vmatpush1.msra.mxu0 0.0
  %456 = vmatprep.subr.mxu0 0.0
  %457 = vmatpush1.msra.mxu0 0.0
  %458 = vmatprep.mubr.f32.mxu0 0.0
  %459 = vmatmul.mubr.f32.gmra.mrb[0].mxu0 %v392
  %v460 = vpop.f32.mrb[0].mxu0
  %v461 = vadd.f32 0.0, %v460
  %v462 = vpop.f32.mrb[0].mxu0
  %463 = vdwg.mxu0
  %v464 = vadd.f32 %v391, %v461
  %v465 = vxor.u32 %v464, 2147483648
  %v466 = vmul.f32 %v465, 1.442695
  %v467 = vpow.pop %v466
  %v468 = vadd.f32 %v467, 1.0
  %v469 = vrcp.pop %v468
  %v470 = vmul.f32 1.0, %v469
  %v471 = vtanh.pop %v464
  %v472 = vmul.f32 %v470, %v379
  %474 = vrot.lane.b32.xlu0 %v471, 64
  %v475 = vpop.permute.xlu0 %474
  %v477 = vmul.f32 %v470, %v475
  %479 = vrot.lane.b32.xlu0 %v477, 32
  %v480 = vpop.permute.xlu0 %479
  %v482 = vadd.f32 %v472, %v480
  %v483 = vtanh.pop %v482
  %485 = vrot.lane.b32.xlu0 %v483, 64
  %v486 = vpop.permute.xlu0 %485
  %v488 = vmul.f32 %v470, %v486
  %490 = vrot.lane.b32.xlu0 %v488, 32
  %v491 = vpop.permute.xlu0 %490
  %493 = vst.msk [vmem:[#allocation3 + $0x10] sm:$0xff] %vm42, %v491
  %v494 = vld [vmem:[#allocation2 + $0x18] sm:$0xff]
  %v495 = vsel %vm42, %v491, 0
  %497 = vmatprep.subr.mxu0 0.0
  %498 = vmatpush1.msra.mxu0 %v180
  %499 = vmatprep.subr.mxu0 0.0
  %500 = vmatpush1.msra.mxu0 %v181
  %501 = vmatprep.subr.mxu0 0.0
  %502 = vmatpush1.msra.mxu0 %v182
  %503 = vmatprep.subr.mxu0 0.0
  %504 = vmatpush1.msra.mxu0 %v183
  %505 = vmatprep.subr.mxu0 0.0
  %506 = vmatpush1.msra.mxu0 0.0
  %507 = vmatprep.subr.mxu0 0.0
  %508 = vmatpush1.msra.mxu0 0.0
  %509 = vmatprep.subr.mxu0 0.0
  %510 = vmatpush1.msra.mxu0 0.0
  %511 = vmatprep.subr.mxu0 0.0
  %512 = vmatpush1.msra.mxu0 0.0
  %513 = vmatprep.subr.mxu0 0.0
  %514 = vmatpush1.msra.mxu0 0.0
  %515 = vmatprep.subr.mxu0 0.0
  %516 = vmatpush1.msra.mxu0 0.0
  %517 = vmatprep.subr.mxu0 0.0
  %518 = vmatpush1.msra.mxu0 0.0
  %519 = vmatprep.subr.mxu0 0.0
  %520 = vmatpush1.msra.mxu0 0.0
  %521 = vmatprep.subr.mxu0 0.0
  %522 = vmatpush1.msra.mxu0 0.0
  %523 = vmatprep.subr.mxu0 0.0
  %524 = vmatpush1.msra.mxu0 0.0
  %525 = vmatprep.subr.mxu0 0.0
  %526 = vmatpush1.msra.mxu0 0.0
  %527 = vmatprep.subr.mxu0 0.0
  %528 = vmatpush1.msra.mxu0 0.0
  %529 = vmatprep.subr.mxu0 0.0
  %530 = vmatpush1.msra.mxu0 0.0
  %531 = vmatprep.subr.mxu0 0.0
  %532 = vmatpush1.msra.mxu0 0.0
  %533 = vmatprep.subr.mxu0 0.0
  %534 = vmatpush1.msra.mxu0 0.0
  %535 = vmatprep.subr.mxu0 0.0
  %536 = vmatpush1.msra.mxu0 0.0
  %537 = vmatprep.subr.mxu0 0.0
  %538 = vmatpush1.msra.mxu0 0.0
  %539 = vmatprep.subr.mxu0 0.0
  %540 = vmatpush1.msra.mxu0 0.0
  %541 = vmatprep.subr.mxu0 0.0
  %542 = vmatpush1.msra.mxu0 0.0
  %543 = vmatprep.subr.mxu0 0.0
  %544 = vmatpush1.msra.mxu0 0.0
  %545 = vmatprep.subr.mxu0 0.0
  %546 = vmatpush1.msra.mxu0 0.0
  %547 = vmatprep.subr.mxu0 0.0
  %548 = vmatpush1.msra.mxu0 0.0
  %549 = vmatprep.subr.mxu0 0.0
  %550 = vmatpush1.msra.mxu0 0.0
  %551 = vmatprep.subr.mxu0 0.0
  %552 = vmatpush1.msra.mxu0 0.0
  %553 = vmatprep.subr.mxu0 0.0
  %554 = vmatpush1.msra.mxu0 0.0
  %555 = vmatprep.subr.mxu0 0.0
  %556 = vmatpush1.msra.mxu0 0.0
  %557 = vmatprep.subr.mxu0 0.0
  %558 = vmatpush1.msra.mxu0 0.0
  %559 = vmatprep.subr.mxu0 0.0
  %560 = vmatpush1.msra.mxu0 0.0
  %561 = vmatprep.mubr.f32.mxu0 0.0
  %562 = vmatmul.mubr.f32.gmra.mrb[0].mxu0 %v495
  %v563 = vpop.f32.mrb[0].mxu0
  %v564 = vadd.f32 0.0, %v563
  %v565 = vpop.f32.mrb[0].mxu0
  %566 = vdwg.mxu0
  %v567 = vadd.f32 %v494, %v564
  %v568 = vxor.u32 %v567, 2147483648
  %v569 = vmul.f32 %v568, 1.442695
  %v570 = vpow.pop %v569
  %v571 = vadd.f32 %v570, 1.0
  %v572 = vrcp.pop %v571
  %v573 = vmul.f32 1.0, %v572
  %v574 = vtanh.pop %v567
  %v575 = vmul.f32 %v573, %v482
  %577 = vrot.lane.b32.xlu0 %v574, 64
  %v578 = vpop.permute.xlu0 %577
  %v580 = vmul.f32 %v573, %v578
  %582 = vrot.lane.b32.xlu0 %v580, 32
  %v583 = vpop.permute.xlu0 %582
  %v585 = vadd.f32 %v575, %v583
  %v586 = vtanh.pop %v585
  %588 = vrot.lane.b32.xlu0 %v586, 64
  %v589 = vpop.permute.xlu0 %588
  %v591 = vmul.f32 %v573, %v589
  %593 = vrot.lane.b32.xlu0 %v591, 32
  %v594 = vpop.permute.xlu0 %593
  %596 = vst.msk [vmem:[#allocation3 + $0x18] sm:$0xff] %vm42, %v594
  %v597 = vld [vmem:[#allocation2 + $0x20] sm:$0xff]
  %v598 = vsel %vm42, %v594, 0
  %600 = vmatprep.subr.mxu0 0.0
  %601 = vmatpush1.msra.mxu0 %v180
  %602 = vmatprep.subr.mxu0 0.0
  %603 = vmatpush1.msra.mxu0 %v181
  %604 = vmatprep.subr.mxu0 0.0
  %605 = vmatpush1.msra.mxu0 %v182
  %606 = vmatprep.subr.mxu0 0.0
  %607 = vmatpush1.msra.mxu0 %v183
  %608 = vmatprep.subr.mxu0 0.0
  %609 = vmatpush1.msra.mxu0 0.0
  %610 = vmatprep.subr.mxu0 0.0
  %611 = vmatpush1.msra.mxu0 0.0
  %612 = vmatprep.subr.mxu0 0.0
  %613 = vmatpush1.msra.mxu0 0.0
  %614 = vmatprep.subr.mxu0 0.0
  %615 = vmatpush1.msra.mxu0 0.0
  %616 = vmatprep.subr.mxu0 0.0
  %617 = vmatpush1.msra.mxu0 0.0
  %618 = vmatprep.subr.mxu0 0.0
  %619 = vmatpush1.msra.mxu0 0.0
  %620 = vmatprep.subr.mxu0 0.0
  %621 = vmatpush1.msra.mxu0 0.0
  %622 = vmatprep.subr.mxu0 0.0
  %623 = vmatpush1.msra.mxu0 0.0
  %624 = vmatprep.subr.mxu0 0.0
  %625 = vmatpush1.msra.mxu0 0.0
  %626 = vmatprep.subr.mxu0 0.0
  %627 = vmatpush1.msra.mxu0 0.0
  %628 = vmatprep.subr.mxu0 0.0
  %629 = vmatpush1.msra.mxu0 0.0
  %630 = vmatprep.subr.mxu0 0.0
  %631 = vmatpush1.msra.mxu0 0.0
  %632 = vmatprep.subr.mxu0 0.0
  %633 = vmatpush1.msra.mxu0 0.0
  %634 = vmatprep.subr.mxu0 0.0
  %635 = vmatpush1.msra.mxu0 0.0
  %636 = vmatprep.subr.mxu0 0.0
  %637 = vmatpush1.msra.mxu0 0.0
  %638 = vmatprep.subr.mxu0 0.0
  %639 = vmatpush1.msra.mxu0 0.0
  %640 = vmatprep.subr.mxu0 0.0
  %641 = vmatpush1.msra.mxu0 0.0
  %642 = vmatprep.subr.mxu0 0.0
  %643 = vmatpush1.msra.mxu0 0.0
  %644 = vmatprep.subr.mxu0 0.0
  %645 = vmatpush1.msra.mxu0 0.0
  %646 = vmatprep.subr.mxu0 0.0
  %647 = vmatpush1.msra.mxu0 0.0
  %648 = vmatprep.subr.mxu0 0.0
  %649 = vmatpush1.msra.mxu0 0.0
  %650 = vmatprep.subr.mxu0 0.0
  %651 = vmatpush1.msra.mxu0 0.0
  %652 = vmatprep.subr.mxu0 0.0
  %653 = vmatpush1.msra.mxu0 0.0
  %654 = vmatprep.subr.mxu0 0.0
  %655 = vmatpush1.msra.mxu0 0.0
  %656 = vmatprep.subr.mxu0 0.0
  %657 = vmatpush1.msra.mxu0 0.0
  %658 = vmatprep.subr.mxu0 0.0
  %659 = vmatpush1.msra.mxu0 0.0
  %660 = vmatprep.subr.mxu0 0.0
  %661 = vmatpush1.msra.mxu0 0.0
  %662 = vmatprep.subr.mxu0 0.0
  %663 = vmatpush1.msra.mxu0 0.0
  %664 = vmatprep.mubr.f32.mxu0 0.0
  %665 = vmatmul.mubr.f32.gmra.mrb[0].mxu0 %v598
  %v666 = vpop.f32.mrb[0].mxu0
  %v667 = vadd.f32 0.0, %v666
  %v668 = vpop.f32.mrb[0].mxu0
  %669 = vdwg.mxu0
  %v670 = vadd.f32 %v597, %v667
  %v671 = vxor.u32 %v670, 2147483648
  %v672 = vmul.f32 %v671, 1.442695
  %v673 = vpow.pop %v672
  %v674 = vadd.f32 %v673, 1.0
  %v675 = vrcp.pop %v674
  %v676 = vmul.f32 1.0, %v675
  %v677 = vtanh.pop %v670
  %v678 = vmul.f32 %v676, %v585
  %680 = vrot.lane.b32.xlu0 %v677, 64
  %v681 = vpop.permute.xlu0 %680
  %v683 = vmul.f32 %v676, %v681
  %685 = vrot.lane.b32.xlu0 %v683, 32
  %v686 = vpop.permute.xlu0 %685
  %v688 = vadd.f32 %v678, %v686
  %v689 = vtanh.pop %v688
  %691 = vrot.lane.b32.xlu0 %v689, 64
  %v692 = vpop.permute.xlu0 %691
  %v694 = vmul.f32 %v676, %v692
  %696 = vrot.lane.b32.xlu0 %v694, 32
  %v697 = vpop.permute.xlu0 %696
  %699 = vst.msk [vmem:[#allocation3 + $0x20] sm:$0xff] %vm42, %v697
  %v700 = vld [vmem:[#allocation2 + $0x28] sm:$0xff]
  %v701 = vsel %vm42, %v697, 0
  %703 = vmatprep.subr.mxu0 0.0
  %704 = vmatpush1.msra.mxu0 %v180
  %705 = vmatprep.subr.mxu0 0.0
  %706 = vmatpush1.msra.mxu0 %v181
  %707 = vmatprep.subr.mxu0 0.0
  %708 = vmatpush1.msra.mxu0 %v182
  %709 = vmatprep.subr.mxu0 0.0
  %710 = vmatpush1.msra.mxu0 %v183
  %711 = vmatprep.subr.mxu0 0.0
  %712 = vmatpush1.msra.mxu0 0.0
  %713 = vmatprep.subr.mxu0 0.0
  %714 = vmatpush1.msra.mxu0 0.0
  %715 = vmatprep.subr.mxu0 0.0
  %716 = vmatpush1.msra.mxu0 0.0
  %717 = vmatprep.subr.mxu0 0.0
  %718 = vmatpush1.msra.mxu0 0.0
  %719 = vmatprep.subr.mxu0 0.0
  %720 = vmatpush1.msra.mxu0 0.0
  %721 = vmatprep.subr.mxu0 0.0
  %722 = vmatpush1.msra.mxu0 0.0
  %723 = vmatprep.subr.mxu0 0.0
  %724 = vmatpush1.msra.mxu0 0.0
  %725 = vmatprep.subr.mxu0 0.0
  %726 = vmatpush1.msra.mxu0 0.0
  %727 = vmatprep.subr.mxu0 0.0
  %728 = vmatpush1.msra.mxu0 0.0
  %729 = vmatprep.subr.mxu0 0.0
  %730 = vmatpush1.msra.mxu0 0.0
  %731 = vmatprep.subr.mxu0 0.0
  %732 = vmatpush1.msra.mxu0 0.0
  %733 = vmatprep.subr.mxu0 0.0
  %734 = vmatpush1.msra.mxu0 0.0
  %735 = vmatprep.subr.mxu0 0.0
  %736 = vmatpush1.msra.mxu0 0.0
  %737 = vmatprep.subr.mxu0 0.0
  %738 = vmatpush1.msra.mxu0 0.0
  %739 = vmatprep.subr.mxu0 0.0
  %740 = vmatpush1.msra.mxu0 0.0
  %741 = vmatprep.subr.mxu0 0.0
  %742 = vmatpush1.msra.mxu0 0.0
  %743 = vmatprep.subr.mxu0 0.0
  %744 = vmatpush1.msra.mxu0 0.0
  %745 = vmatprep.subr.mxu0 0.0
  %746 = vmatpush1.msra.mxu0 0.0
  %747 = vmatprep.subr.mxu0 0.0
  %748 = vmatpush1.msra.mxu0 0.0
  %749 = vmatprep.subr.mxu0 0.0
  %750 = vmatpush1.msra.mxu0 0.0
  %751 = vmatprep.subr.mxu0 0.0
  %752 = vmatpush1.msra.mxu0 0.0
  %753 = vmatprep.subr.mxu0 0.0
  %754 = vmatpush1.msra.mxu0 0.0
  %755 = vmatprep.subr.mxu0 0.0
  %756 = vmatpush1.msra.mxu0 0.0
  %757 = vmatprep.subr.mxu0 0.0
  %758 = vmatpush1.msra.mxu0 0.0
  %759 = vmatprep.subr.mxu0 0.0
  %760 = vmatpush1.msra.mxu0 0.0
  %761 = vmatprep.subr.mxu0 0.0
  %762 = vmatpush1.msra.mxu0 0.0
  %763 = vmatprep.subr.mxu0 0.0
  %764 = vmatpush1.msra.mxu0 0.0
  %765 = vmatprep.subr.mxu0 0.0
  %766 = vmatpush1.msra.mxu0 0.0
  %767 = vmatprep.mubr.f32.mxu0 0.0
  %768 = vmatmul.mubr.f32.gmra.mrb[0].mxu0 %v701
  %v769 = vpop.f32.mrb[0].mxu0
  %v770 = vadd.f32 0.0, %v769
  %v771 = vpop.f32.mrb[0].mxu0
  %772 = vdwg.mxu0
  %v773 = vadd.f32 %v700, %v770
  %v774 = vxor.u32 %v773, 2147483648
  %v775 = vmul.f32 %v774, 1.442695
  %v776 = vpow.pop %v775
  %v777 = vadd.f32 %v776, 1.0
  %v778 = vrcp.pop %v777
  %v779 = vmul.f32 1.0, %v778
  %v780 = vtanh.pop %v773
  %v781 = vmul.f32 %v779, %v688
  %783 = vrot.lane.b32.xlu0 %v780, 64
  %v784 = vpop.permute.xlu0 %783
  %v786 = vmul.f32 %v779, %v784
  %788 = vrot.lane.b32.xlu0 %v786, 32
  %v789 = vpop.permute.xlu0 %788
  %v791 = vadd.f32 %v781, %v789
  %v792 = vtanh.pop %v791
  %794 = vrot.lane.b32.xlu0 %v792, 64
  %v795 = vpop.permute.xlu0 %794
  %v797 = vmul.f32 %v779, %v795
  %799 = vrot.lane.b32.xlu0 %v797, 32
  %v800 = vpop.permute.xlu0 %799
  %802 = vst.msk [vmem:[#allocation3 + $0x28] sm:$0xff] %vm42, %v800
  %v803 = vld [vmem:[#allocation2 + $0x30] sm:$0xff]
  %v804 = vsel %vm42, %v800, 0
  %806 = vmatprep.subr.mxu0 0.0
  %807 = vmatpush1.msra.mxu0 %v180
  %808 = vmatprep.subr.mxu0 0.0
  %809 = vmatpush1.msra.mxu0 %v181
  %810 = vmatprep.subr.mxu0 0.0
  %811 = vmatpush1.msra.mxu0 %v182
  %812 = vmatprep.subr.mxu0 0.0
  %813 = vmatpush1.msra.mxu0 %v183
  %814 = vmatprep.subr.mxu0 0.0
  %815 = vmatpush1.msra.mxu0 0.0
  %816 = vmatprep.subr.mxu0 0.0
  %817 = vmatpush1.msra.mxu0 0.0
  %818 = vmatprep.subr.mxu0 0.0
  %819 = vmatpush1.msra.mxu0 0.0
  %820 = vmatprep.subr.mxu0 0.0
  %821 = vmatpush1.msra.mxu0 0.0
  %822 = vmatprep.subr.mxu0 0.0
  %823 = vmatpush1.msra.mxu0 0.0
  %824 = vmatprep.subr.mxu0 0.0
  %825 = vmatpush1.msra.mxu0 0.0
  %826 = vmatprep.subr.mxu0 0.0
  %827 = vmatpush1.msra.mxu0 0.0
  %828 = vmatprep.subr.mxu0 0.0
  %829 = vmatpush1.msra.mxu0 0.0
  %830 = vmatprep.subr.mxu0 0.0
  %831 = vmatpush1.msra.mxu0 0.0
  %832 = vmatprep.subr.mxu0 0.0
  %833 = vmatpush1.msra.mxu0 0.0
  %834 = vmatprep.subr.mxu0 0.0
  %835 = vmatpush1.msra.mxu0 0.0
  %836 = vmatprep.subr.mxu0 0.0
  %837 = vmatpush1.msra.mxu0 0.0
  %838 = vmatprep.subr.mxu0 0.0
  %839 = vmatpush1.msra.mxu0 0.0
  %840 = vmatprep.subr.mxu0 0.0
  %841 = vmatpush1.msra.mxu0 0.0
  %842 = vmatprep.subr.mxu0 0.0
  %843 = vmatpush1.msra.mxu0 0.0
  %844 = vmatprep.subr.mxu0 0.0
  %845 = vmatpush1.msra.mxu0 0.0
  %846 = vmatprep.subr.mxu0 0.0
  %847 = vmatpush1.msra.mxu0 0.0
  %848 = vmatprep.subr.mxu0 0.0
  %849 = vmatpush1.msra.mxu0 0.0
  %850 = vmatprep.subr.mxu0 0.0
  %851 = vmatpush1.msra.mxu0 0.0
  %852 = vmatprep.subr.mxu0 0.0
  %853 = vmatpush1.msra.mxu0 0.0
  %854 = vmatprep.subr.mxu0 0.0
  %855 = vmatpush1.msra.mxu0 0.0
  %856 = vmatprep.subr.mxu0 0.0
  %857 = vmatpush1.msra.mxu0 0.0
  %858 = vmatprep.subr.mxu0 0.0
  %859 = vmatpush1.msra.mxu0 0.0
  %860 = vmatprep.subr.mxu0 0.0
  %861 = vmatpush1.msra.mxu0 0.0
  %862 = vmatprep.subr.mxu0 0.0
  %863 = vmatpush1.msra.mxu0 0.0
  %864 = vmatprep.subr.mxu0 0.0
  %865 = vmatpush1.msra.mxu0 0.0
  %866 = vmatprep.subr.mxu0 0.0
  %867 = vmatpush1.msra.mxu0 0.0
  %868 = vmatprep.subr.mxu0 0.0
  %869 = vmatpush1.msra.mxu0 0.0
  %870 = vmatprep.mubr.f32.mxu0 0.0
  %871 = vmatmul.mubr.f32.gmra.mrb[0].mxu0 %v804
  %v872 = vpop.f32.mrb[0].mxu0
  %v873 = vadd.f32 0.0, %v872
  %v874 = vpop.f32.mrb[0].mxu0
  %875 = vdwg.mxu0
  %v876 = vadd.f32 %v803, %v873
  %v877 = vxor.u32 %v876, 2147483648
  %v878 = vmul.f32 %v877, 1.442695
  %v879 = vpow.pop %v878
  %v880 = vadd.f32 %v879, 1.0
  %v881 = vrcp.pop %v880
  %v882 = vmul.f32 1.0, %v881
  %v883 = vtanh.pop %v876
  %v884 = vmul.f32 %v882, %v791
  %886 = vrot.lane.b32.xlu0 %v883, 64
  %v887 = vpop.permute.xlu0 %886
  %v889 = vmul.f32 %v882, %v887
  %891 = vrot.lane.b32.xlu0 %v889, 32
  %v892 = vpop.permute.xlu0 %891
  %v894 = vadd.f32 %v884, %v892
  %v895 = vtanh.pop %v894
  %897 = vrot.lane.b32.xlu0 %v895, 64
  %v898 = vpop.permute.xlu0 %897
  %v900 = vmul.f32 %v882, %v898
  %902 = vrot.lane.b32.xlu0 %v900, 32
  %v903 = vpop.permute.xlu0 %902
  %905 = vst.msk [vmem:[#allocation3 + $0x30] sm:$0xff] %vm42, %v903
  %v906 = vld [vmem:[#allocation2 + $0x38] sm:$0xff]
  %v907 = vsel %vm42, %v903, 0
  %909 = vmatprep.subr.mxu0 0.0
  %910 = vmatpush1.msra.mxu0 %v180
  %911 = vmatprep.subr.mxu0 0.0
  %912 = vmatpush1.msra.mxu0 %v181
  %913 = vmatprep.subr.mxu0 0.0
  %914 = vmatpush1.msra.mxu0 %v182
  %915 = vmatprep.subr.mxu0 0.0
  %916 = vmatpush1.msra.mxu0 %v183
  %917 = vmatprep.subr.mxu0 0.0
  %918 = vmatpush1.msra.mxu0 0.0
  %919 = vmatprep.subr.mxu0 0.0
  %920 = vmatpush1.msra.mxu0 0.0
  %921 = vmatprep.subr.mxu0 0.0
  %922 = vmatpush1.msra.mxu0 0.0
  %923 = vmatprep.subr.mxu0 0.0
  %924 = vmatpush1.msra.mxu0 0.0
  %925 = vmatprep.subr.mxu0 0.0
  %926 = vmatpush1.msra.mxu0 0.0
  %927 = vmatprep.subr.mxu0 0.0
  %928 = vmatpush1.msra.mxu0 0.0
  %929 = vmatprep.subr.mxu0 0.0
  %930 = vmatpush1.msra.mxu0 0.0
  %931 = vmatprep.subr.mxu0 0.0
  %932 = vmatpush1.msra.mxu0 0.0
  %933 = vmatprep.subr.mxu0 0.0
  %934 = vmatpush1.msra.mxu0 0.0
  %935 = vmatprep.subr.mxu0 0.0
  %936 = vmatpush1.msra.mxu0 0.0
  %937 = vmatprep.subr.mxu0 0.0
  %938 = vmatpush1.msra.mxu0 0.0
  %939 = vmatprep.subr.mxu0 0.0
  %940 = vmatpush1.msra.mxu0 0.0
  %941 = vmatprep.subr.mxu0 0.0
  %942 = vmatpush1.msra.mxu0 0.0
  %943 = vmatprep.subr.mxu0 0.0
  %944 = vmatpush1.msra.mxu0 0.0
  %945 = vmatprep.subr.mxu0 0.0
  %946 = vmatpush1.msra.mxu0 0.0
  %947 = vmatprep.subr.mxu0 0.0
  %948 = vmatpush1.msra.mxu0 0.0
  %949 = vmatprep.subr.mxu0 0.0
  %950 = vmatpush1.msra.mxu0 0.0
  %951 = vmatprep.subr.mxu0 0.0
  %952 = vmatpush1.msra.mxu0 0.0
  %953 = vmatprep.subr.mxu0 0.0
  %954 = vmatpush1.msra.mxu0 0.0
  %955 = vmatprep.subr.mxu0 0.0
  %956 = vmatpush1.msra.mxu0 0.0
  %957 = vmatprep.subr.mxu0 0.0
  %958 = vmatpush1.msra.mxu0 0.0
  %959 = vmatprep.subr.mxu0 0.0
  %960 = vmatpush1.msra.mxu0 0.0
  %961 = vmatprep.subr.mxu0 0.0
  %962 = vmatpush1.msra.mxu0 0.0
  %963 = vmatprep.subr.mxu0 0.0
  %964 = vmatpush1.msra.mxu0 0.0
  %965 = vmatprep.subr.mxu0 0.0
  %966 = vmatpush1.msra.mxu0 0.0
  %967 = vmatprep.subr.mxu0 0.0
  %968 = vmatpush1.msra.mxu0 0.0
  %969 = vmatprep.subr.mxu0 0.0
  %970 = vmatpush1.msra.mxu0 0.0
  %971 = vmatprep.subr.mxu0 0.0
  %972 = vmatpush1.msra.mxu0 0.0
  %973 = vmatprep.mubr.f32.mxu0 0.0
  %974 = vmatmul.mubr.f32.gmra.mrb[0].mxu0 %v907
  %v975 = vpop.f32.mrb[0].mxu0
  %v976 = vadd.f32 0.0, %v975
  %v977 = vpop.f32.mrb[0].mxu0
  %978 = vdwg.mxu0
  %v979 = vadd.f32 %v906, %v976
  %v980 = vxor.u32 %v979, 2147483648
  %v981 = vmul.f32 %v980, 1.442695
  %v982 = vpow.pop %v981
  %v983 = vadd.f32 %v982, 1.0
  %v984 = vrcp.pop %v983
  %v985 = vmul.f32 1.0, %v984
  %v986 = vtanh.pop %v979
  %v987 = vmul.f32 %v985, %v894
  %989 = vrot.lane.b32.xlu0 %v986, 64
  %v990 = vpop.permute.xlu0 %989
  %v992 = vmul.f32 %v985, %v990
  %994 = vrot.lane.b32.xlu0 %v992, 32
  %v995 = vpop.permute.xlu0 %994
  %v997 = vadd.f32 %v987, %v995
  %v998 = vtanh.pop %v997
  %1000 = vrot.lane.b32.xlu0 %v998, 64
  %v1001 = vpop.permute.xlu0 %1000
  %v1003 = vmul.f32 %v985, %v1001
  %1005 = vrot.lane.b32.xlu0 %v1003, 32
  %v1006 = vpop.permute.xlu0 %1005
  %1008 = vst.msk [vmem:[#allocation3 + $0x38] sm:$0xff] %vm42, %v1006
  %v1009 = vld [vmem:[#allocation3] sm:$0xff]
  %v1010 = vld [vmem:[#allocation3 + $0x8] sm:$0xff]
  %v1011 = vld [vmem:[#allocation3 + $0x10] sm:$0xff]
  %v1012 = vld [vmem:[#allocation3 + $0x18] sm:$0xff]
  %v1013 = vld [vmem:[#allocation3 + $0x20] sm:$0xff]
  %v1014 = vld [vmem:[#allocation3 + $0x28] sm:$0xff]
  %v1015 = vld [vmem:[#allocation3 + $0x30] sm:$0xff]
  %v1016 = vld [vmem:[#allocation3 + $0x38] sm:$0xff]
  %v1017 = vld [vmem:[%s4] sm:$0xff]
  %v1018 = vld [vmem:[%s4 + $0x8] sm:$0xff]
  %v1019 = vld [vmem:[%s4 + $0x10] sm:$0xff]
  %v1020 = vld [vmem:[%s4 + $0x18] sm:$0xff]
  %v1021 = vld [vmem:[%s5] sm:$0x1]
  %v1023 = vlaneseq
  %v1024 = vshrl.u32 %v1023, 7
  %v1025 = vsub.s32 0, %v1024
  %v1026 = vrot.slane %v1021, %v1025
  %v1029 = vsel %vm42, %v1009, 0
  %v1032 = vsel %vm42, %v1010, 0
  %v1035 = vsel %vm42, %v1011, 0
  %v1038 = vsel %vm42, %v1012, 0
  %v1041 = vsel %vm42, %v1013, 0
  %v1044 = vsel %vm42, %v1014, 0
  %v1047 = vsel %vm42, %v1015, 0
  %v1050 = vsel %vm42, %v1016, 0
  %1052 = vmatprep.subr.mxu0 0.0
  %1053 = vmatpush1.msra.mxu0 %v1017
  %1054 = vmatprep.subr.mxu0 0.0
  %1055 = vmatpush1.msra.mxu0 %v1018
  %1056 = vmatprep.subr.mxu0 0.0
  %1057 = vmatpush1.msra.mxu0 %v1019
  %1058 = vmatprep.subr.mxu0 0.0
  %1059 = vmatpush1.msra.mxu0 %v1020
  %1060 = vmatprep.subr.mxu0 0.0
  %1061 = vmatpush1.msra.mxu0 0.0
  %1062 = vmatprep.subr.mxu0 0.0
  %1063 = vmatpush1.msra.mxu0 0.0
  %1064 = vmatprep.subr.mxu0 0.0
  %1065 = vmatpush1.msra.mxu0 0.0
  %1066 = vmatprep.subr.mxu0 0.0
  %1067 = vmatpush1.msra.mxu0 0.0
  %1068 = vmatprep.subr.mxu0 0.0
  %1069 = vmatpush1.msra.mxu0 0.0
  %1070 = vmatprep.subr.mxu0 0.0
  %1071 = vmatpush1.msra.mxu0 0.0
  %1072 = vmatprep.subr.mxu0 0.0
  %1073 = vmatpush1.msra.mxu0 0.0
  %1074 = vmatprep.subr.mxu0 0.0
  %1075 = vmatpush1.msra.mxu0 0.0
  %1076 = vmatprep.subr.mxu0 0.0
  %1077 = vmatpush1.msra.mxu0 0.0
  %1078 = vmatprep.subr.mxu0 0.0
  %1079 = vmatpush1.msra.mxu0 0.0
  %1080 = vmatprep.subr.mxu0 0.0
  %1081 = vmatpush1.msra.mxu0 0.0
  %1082 = vmatprep.subr.mxu0 0.0
  %1083 = vmatpush1.msra.mxu0 0.0
  %1084 = vmatprep.subr.mxu0 0.0
  %1085 = vmatpush1.msra.mxu0 0.0
  %1086 = vmatprep.subr.mxu0 0.0
  %1087 = vmatpush1.msra.mxu0 0.0
  %1088 = vmatprep.subr.mxu0 0.0
  %1089 = vmatpush1.msra.mxu0 0.0
  %1090 = vmatprep.subr.mxu0 0.0
  %1091 = vmatpush1.msra.mxu0 0.0
  %1092 = vmatprep.subr.mxu0 0.0
  %1093 = vmatpush1.msra.mxu0 0.0
  %1094 = vmatprep.subr.mxu0 0.0
  %1095 = vmatpush1.msra.mxu0 0.0
  %1096 = vmatprep.subr.mxu0 0.0
  %1097 = vmatpush1.msra.mxu0 0.0
  %1098 = vmatprep.subr.mxu0 0.0
  %1099 = vmatpush1.msra.mxu0 0.0
  %1100 = vmatprep.subr.mxu0 0.0
  %1101 = vmatpush1.msra.mxu0 0.0
  %1102 = vmatprep.subr.mxu0 0.0
  %1103 = vmatpush1.msra.mxu0 0.0
  %1104 = vmatprep.subr.mxu0 0.0
  %1105 = vmatpush1.msra.mxu0 0.0
  %1106 = vmatprep.subr.mxu0 0.0
  %1107 = vmatpush1.msra.mxu0 0.0
  %1108 = vmatprep.subr.mxu0 0.0
  %1109 = vmatpush1.msra.mxu0 0.0
  %1110 = vmatprep.subr.mxu0 0.0
  %1111 = vmatpush1.msra.mxu0 0.0
  %1112 = vmatprep.subr.mxu0 0.0
  %1113 = vmatpush1.msra.mxu0 0.0
  %1114 = vmatprep.subr.mxu0 0.0
  %1115 = vmatpush1.msra.mxu0 0.0
  %1116 = vmatprep.mubr.f32.mxu0 0.0
  %1117 = vmatmul.mubr.f32.gmra.mrb[0].mxu0 %v1029
  %v1118 = vpop.f32.mrb[0].mxu0
  %v1119 = vadd.f32 %v1026, %v1118
  %v1120 = vpop.f32.mrb[0].mxu0
  %1121 = vmatprep.mubr.f32.mxu0 0.0
  %1122 = vmatmul.mubr.f32.gmra.mrb[0].mxu0 %v1032
  %v1123 = vpop.f32.mrb[0].mxu0
  %v1124 = vadd.f32 %v1026, %v1123
  %v1125 = vpop.f32.mrb[0].mxu0
  %1126 = vmatprep.mubr.f32.mxu0 0.0
  %1127 = vmatmul.mubr.f32.gmra.mrb[0].mxu0 %v1035
  %v1128 = vpop.f32.mrb[0].mxu0
  %v1129 = vadd.f32 %v1026, %v1128
  %v1130 = vpop.f32.mrb[0].mxu0
  %1131 = vmatprep.mubr.f32.mxu0 0.0
  %1132 = vmatmul.mubr.f32.gmra.mrb[0].mxu0 %v1038
  %v1133 = vpop.f32.mrb[0].mxu0
  %v1134 = vadd.f32 %v1026, %v1133
  %v1135 = vpop.f32.mrb[0].mxu0
  %1136 = vmatprep.mubr.f32.mxu0 0.0
  %1137 = vmatmul.mubr.f32.gmra.mrb[0].mxu0 %v1041
  %v1138 = vpop.f32.mrb[0].mxu0
  %v1139 = vadd.f32 %v1026, %v1138
  %v1140 = vpop.f32.mrb[0].mxu0
  %1141 = vmatprep.mubr.f32.mxu0 0.0
  %1142 = vmatmul.mubr.f32.gmra.mrb[0].mxu0 %v1044
  %v1143 = vpop.f32.mrb[0].mxu0
  %v1144 = vadd.f32 %v1026, %v1143
  %v1145 = vpop.f32.mrb[0].mxu0
  %1146 = vmatprep.mubr.f32.mxu0 0.0
  %1147 = vmatmul.mubr.f32.gmra.mrb[0].mxu0 %v1047
  %v1148 = vpop.f32.mrb[0].mxu0
  %v1149 = vadd.f32 %v1026, %v1148
  %v1150 = vpop.f32.mrb[0].mxu0
  %1151 = vmatprep.mubr.f32.mxu0 0.0
  %1152 = vmatmul.mubr.f32.gmra.mrb[0].mxu0 %v1050
  %v1153 = vpop.f32.mrb[0].mxu0
  %v1154 = vadd.f32 %v1026, %v1153
  %v1155 = vpop.f32.mrb[0].mxu0
  %1156 = vdwg.mxu0
  %1157 = vst [vmem:[%s6] sm:$0xff] %v1119
  %1158 = vst [vmem:[%s6 + $0x8] sm:$0xff] %v1124
  %1159 = vst [vmem:[%s6 + $0x10] sm:$0xff] %v1129
  %1160 = vst [vmem:[%s6 + $0x18] sm:$0xff] %v1134
  %1161 = vst [vmem:[%s6 + $0x20] sm:$0xff] %v1139
  %1162 = vst [vmem:[%s6 + $0x28] sm:$0xff] %v1144
  %1163 = vst [vmem:[%s6 + $0x30] sm:$0xff] %v1149
  %1164 = vst [vmem:[%s6 + $0x38] sm:$0xff] %v1154
  // Predicated region
  $region26: #{decoder_rnn_forward.1} parent=0 // pred_check
    _
  $region27: #{decoder_rnn_forward.1} parent=0 // pred_check_branch
    %1166 = sbr.rel (0) target = $region29
  $region28: #{decoder_rnn_forward.1} parent=0 // pred_region
    _
  $region29: #{decoder_rnn_forward.1} parent=0 // pred_fallthru
    _
  // Predicated region
  $region30: #{decoder_rnn_forward.1} parent=0 // pred_check
    _
  $region31: #{decoder_rnn_forward.1} parent=0 // pred_check_branch
    %1168 = sbr.rel (0) target = $region33
  $region32: #{decoder_rnn_forward.1} parent=0 // pred_region
    _
  $region33: #{decoder_rnn_forward.1} parent=0 // pred_fallthru
    _

</llo_original>
